<compile_context>
chip_gen: v5e
topology: v5e:2x2
jax: 0.10.0
libtpu: 0.0.40
codegen_flags: <defaults>
</compile_context>

<pallas_src>
import functools
import math

import jax
import jax.numpy as jnp
from jax.experimental import pallas as pl
from jax.experimental.pallas import tpu as pltpu

# ---------------- config (consistent with GPTConfig fields) -----------------
VOCAB_SIZE = 128
BLOCK_SIZE = 16     # max sequence length
N_LAYER = 2
N_HEAD = 2
N_EMBD = 32
LN_EPS = 1e-5

LANES = 128                              # lane width of the packed slabs
W_ROWS_PER_LAYER = 7 * N_EMBD            # qkv(C) + proj(C) + fc(C) + proj2(4C) = 224
S_ROWS_PER_LAYER = 8                     # ln1 g/b, b_qkv, b_proj, ln2 g/b, b_fc, b_proj2


# ---------------- in-kernel helpers -----------------------------------------
def _layernorm(x, g, b, eps=LN_EPS):
    mu = jnp.mean(x, axis=-1, keepdims=True)
    var = jnp.mean((x - mu) ** 2, axis=-1, keepdims=True)
    return (x - mu) * jax.lax.rsqrt(var + eps) * g + b


def _gelu_tanh(x):
    # matches torch.nn.GELU(approximate='tanh')
    c = math.sqrt(2.0 / math.pi)
    return 0.5 * x * (1.0 + jnp.tanh(c * (x + 0.044715 * x * x * x)))


def _mm(a_f32, w_bf16):
    # bf16 MXU matmul with f32 accumulation.
    return jnp.dot(a_f32.astype(jnp.bfloat16), w_bf16,
                   preferred_element_type=jnp.float32)


# ---------------- fused GPT forward kernel ----------------------------------
def gpt_kernel(idx_ref,                     # SMEM (B, T) int32 (scalar prefetch)
               wte_ref, wpe_ref,            # VMEM (V, C) f32, (BLOCK_SIZE, C) f32
               w_ref,                       # VMEM (W_ROWS, 128) bf16 weight slab
               s_ref,                       # VMEM (S_ROWS, 128) f32 bias/LN slab
               o_ref,                       # VMEM (b_chunk*T, V) f32 logits
               xbuf_ref,                    # scratch VMEM (b_chunk*T, C) f32
               *, n_head, n_layer, seq_len, b_chunk):
    C = wte_ref.shape[1]
    T = seq_len
    hd = C // n_head
    rows = b_chunk * T
    scale = 1.0 / math.sqrt(hd)
    chunk = pl.program_id(0)

    # ---- fused embedding gather: x[b*T+t] = wte[idx[b,t]] + wpe[t] ----
    for bb in range(b_chunk):
        b = chunk * b_chunk + bb
        for t in range(T):
            tok = idx_ref[b, t]                               # SMEM scalar
            r = bb * T + t
            xbuf_ref[r:r + 1, :] = (wte_ref[pl.ds(tok, 1), :] +
                                    wpe_ref[t:t + 1, :])
    x = xbuf_ref[...]                                         # (rows, C) f32

    # Causal additive mask: built once, reused for every layer / head / seq.
    row_i = jax.lax.broadcasted_iota(jnp.int32, (T, T), 0)
    col_i = jax.lax.broadcasted_iota(jnp.int32, (T, T), 1)
    neg_mask = jnp.where(row_i >= col_i, 0.0, -1e30).astype(jnp.float32)

    for l in range(n_layer):                 # unrolled layer loop, weights resident
        wb = l * W_ROWS_PER_LAYER
        sb = l * S_ROWS_PER_LAYER
        # static sublane slices of the packed bf16 weight slab
        w_qkv = w_ref[wb + 0 * C: wb + 1 * C, :]        # (C, 128)  cols>=3C are 0
        w_pr  = w_ref[wb + 1 * C: wb + 2 * C, :]        # (C, 128)  cols>=C  are 0
        w_fc  = w_ref[wb + 2 * C: wb + 3 * C, :]        # (C, 128)  exact 4C
        w_pr2 = w_ref[wb + 3 * C: wb + 7 * C, :]        # (4C, 128) cols>=C  are 0
        # static row slices of the packed f32 bias/LN slab
        ln1g  = s_ref[sb + 0: sb + 1, 0:C]
        ln1b  = s_ref[sb + 1: sb + 2, 0:C]
        b_qkv = s_ref[sb + 2: sb + 3, :]                # (1, 128)
        b_pr  = s_ref[sb + 3: sb + 4, 0:C]
        ln2g  = s_ref[sb + 4: sb + 5, 0:C]
        ln2b  = s_ref[sb + 5: sb + 6, 0:C]
        b_fc  = s_ref[sb + 6: sb + 7, :]                # (1, 128)
        b_pr2 = s_ref[sb + 7: sb + 8, 0:C]

        # ---- attention branch: x + c_proj(attn(ln_1(x))) ----
        h = _layernorm(x, ln1g, ln1b)
        qkv = (_mm(h, w_qkv) + b_qkv).astype(jnp.bfloat16)    # (rows, 128) bf16
        attn = jnp.zeros((rows, LANES), jnp.float32)
        for hh in range(n_head):
            y_seq = []
            for bbq in range(b_chunk):                        # per-sequence attention
                r0 = bbq * T
                q = qkv[r0:r0 + T, 0 * C + hh * hd: 0 * C + (hh + 1) * hd]
                k = qkv[r0:r0 + T, 1 * C + hh * hd: 1 * C + (hh + 1) * hd]
                v = qkv[r0:r0 + T, 2 * C + hh * hd: 2 * C + (hh + 1) * hd]
                s = jax.lax.dot_general(q, k, (((1,), (1,)), ((), ())),
                                        preferred_element_type=jnp.float32)
                s = s * scale + neg_mask
                s = s - jnp.max(s, axis=-1, keepdims=True)
                p = jnp.exp(s)
                p = p * pl.reciprocal(jnp.sum(p, axis=-1, keepdims=True),
                                      approx=True)
                y_seq.append(jnp.dot(p.astype(jnp.bfloat16), v,
                                     preferred_element_type=jnp.float32))
            y_h = y_seq[0] if b_chunk == 1 else jnp.concatenate(y_seq, axis=0)
            # per-head projection accumulation (no head concat)
            attn = attn + jnp.dot(y_h.astype(jnp.bfloat16),
                                  w_pr[hh * hd:(hh + 1) * hd, :],
                                  preferred_element_type=jnp.float32)
        x = x + attn[:, 0:C] + b_pr

        # ---- MLP branch: x + c_proj(gelu(c_fc(ln_2(x)))) ----
        h = _layernorm(x, ln2g, ln2b)
        h = _gelu_tanh(_mm(h, w_fc) + b_fc)                   # (rows, 4C=128)
        x = x + _mm(h, w_pr2)[:, 0:C] + b_pr2

    # ---- final LayerNorm + lm_head (lane-dense (rows, 128) HBM output) ----
    wb = n_layer * W_ROWS_PER_LAYER
    sb = n_layer * S_ROWS_PER_LAYER
    w_lm = w_ref[wb: wb + C, :]                               # (C, V)
    lnfg = s_ref[sb + 0: sb + 1, 0:C]
    lnfb = s_ref[sb + 1: sb + 2, 0:C]
    o_ref[...] = _mm(_layernorm(x, lnfg, lnfb), w_lm)


def run_gpt(idx, params, *, grid_b=1):
    """grid_b=1: single grid step (v5e/v6e).  grid_b=2: 2-way parallel for v7x."""
    B, T = idx.shape
    assert B % grid_b == 0
    b_chunk = B // grid_b
    V, C = params['wte'].shape

    grid_spec = pltpu.PrefetchScalarGridSpec(
        num_scalar_prefetch=1,          # idx -> SMEM, fused embedding gather
        grid=(grid_b,),
        in_specs=[
            pl.BlockSpec(params['wte'].shape, lambda i, idx_r: (0, 0)),
            pl.BlockSpec(params['wpe'].shape, lambda i, idx_r: (0, 0)),
            pl.BlockSpec(params['w_slab'].shape, lambda i, idx_r: (0, 0)),
            pl.BlockSpec(params['s_slab'].shape, lambda i, idx_r: (0, 0)),
        ],
        out_specs=pl.BlockSpec((b_chunk * T, V), lambda i, idx_r: (i, 0)),
        scratch_shapes=[pltpu.VMEM((b_chunk * T, C), jnp.float32)],
    )
    out = pl.pallas_call(
        functools.partial(gpt_kernel, n_head=N_HEAD, n_layer=N_LAYER,
                          seq_len=T, b_chunk=b_chunk),
        grid_spec=grid_spec,
        out_shape=jax.ShapeDtypeStruct((B * T, V), jnp.float32),
        compiler_params=pltpu.CompilerParams(
            dimension_semantics=("parallel",)),
    )(idx.astype(jnp.int32), params['wte'], params['wpe'],
      params['w_slab'], params['s_slab'])
    return out.reshape(B, T, V)


# ---------------- parameter init (mirrors GPT._init_weights) -----------------
def init_params(key):
    std = 0.02
    std_proj = 0.02 * (2 * N_LAYER) ** (-0.5)    # NANOGPT_SCALE_INIT projections
    C, V, L = N_EMBD, VOCAB_SIZE, N_LAYER

    keys = iter(jax.random.split(key, 3 + 4 * L))

    def normal(shape, s):
        return jax.random.normal(next(keys), shape, jnp.float32) * s

    def pad_cols(w):
        return jnp.pad(w, ((0, 0), (0, LANES - w.shape[1])))

    wte = normal((V, C), std)
    wpe = normal((BLOCK_SIZE, C), std)

    ones_c = pad_cols(jnp.ones((1, C), jnp.float32))
    zeros_row = jnp.zeros((1, LANES), jnp.float32)

    w_blocks, s_rows = [], []
    for _ in range(L):
        w_blocks += [pad_cols(normal((C, 3 * C), std)),        # c_attn
                     pad_cols(normal((C, C), std_proj)),       # attn c_proj
                     pad_cols(normal((C, 4 * C), std)),        # mlp c_fc
                     pad_cols(normal((4 * C, C), std_proj))]   # mlp c_proj
        s_rows += [ones_c,      # ln1 gamma
                   zeros_row,   # ln1 beta
                   zeros_row,   # b_qkv (3C wide, lane-padded)
                   zeros_row,   # b_proj
                   ones_c,      # ln2 gamma
                   zeros_row,   # ln2 beta
                   zeros_row,   # b_fc (4C = 128 wide)
                   zeros_row]   # b_proj2
    # NOTE: the reference assigns `wte.weights = lm_head.weight` (a typo), so
    # the two are NOT actually tied; both get independent std=0.02 normal init.
    w_blocks.append(pad_cols(normal((C, V), std)))             # lm_head
    s_rows += [ones_c, zeros_row]                              # ln_f gamma / beta

    return {
        'wte': wte,                                                     # (V, C) f32
        'wpe': wpe,                                                     # (16, C) f32
        'w_slab': jnp.concatenate(w_blocks, axis=0).astype(jnp.bfloat16),  # (480, 128)
        's_slab': jnp.concatenate(s_rows, axis=0),                         # (18, 128) f32
    }


# ---------------- full forward ------------------------------------------------
def gpt_forward(params, idx, grid_b=1):
    B, T = idx.shape
    assert T <= BLOCK_SIZE
    # TODO(synk): cross-entropy loss path (targets) not implemented; forward returns logits only.
    return run_gpt(idx, params, grid_b=grid_b)


if __name__ == "__main__":
    key = jax.random.PRNGKey(0)
    pkey, ikey = jax.random.split(key)
    params = init_params(pkey)

    B, T = 2, 8
    idx = jax.random.randint(ikey, (B, T), 0, VOCAB_SIZE, dtype=jnp.int32)

    # grid_b=1 collapses the grid to a single step (v5e/v6e); use grid_b=2 on v7x.
    fwd = jax.jit(lambda p, i: gpt_forward(p, i, grid_b=1))
    logits = jax.block_until_ready(fwd(params, idx))

    assert logits.shape == (B, T, VOCAB_SIZE)
    assert bool(jnp.all(jnp.isfinite(logits)))
    print("KERNEL_OK")
</pallas_src>

<mosaic_0001>
module attributes {stable_mosaic.version = 11 : i64} {
  func.func @gpt_kernel(%arg0: i32, %arg1: memref<2x8xi32, #tpu.memory_space<smem>>, %arg2: memref<128x32xf32, #tpu.memory_space<vmem>>, %arg3: memref<16x32xf32, #tpu.memory_space<vmem>>, %arg4: memref<480x128xbf16, #tpu.memory_space<vmem>>, %arg5: memref<18x128xf32, #tpu.memory_space<vmem>>, %arg6: memref<16x128xf32, #tpu.memory_space<vmem>>, %arg7: memref<16x32xf32, #tpu.memory_space<vmem>>) attributes {dimension_semantics = [#tpu.dimension_semantics<parallel>], iteration_bounds = array<i64: 1>, scalar_prefetch = 1 : i64, scratch_operands = 1 : i64, tpu.core_type = #tpu.core_type<tc>, window_params = [{pipeline_mode = #tpu.pipeline_mode<synchronous>, transform_indices = @transform_0, window_bounds = array<i64: 128, 32>}, {pipeline_mode = #tpu.pipeline_mode<synchronous>, transform_indices = @transform_1, window_bounds = array<i64: 16, 32>}, {pipeline_mode = #tpu.pipeline_mode<synchronous>, transform_indices = @transform_2, window_bounds = array<i64: 480, 128>}, {pipeline_mode = #tpu.pipeline_mode<synchronous>, transform_indices = @transform_3, window_bounds = array<i64: 18, 128>}, {transform_indices = @transform_4, window_bounds = array<i64: 16, 128>}]} {
    %c2_i32 = arith.constant 2 : i32
    %0 = arith.muli %arg0, %c2_i32 : i32
    %c0_i32 = arith.constant 0 : i32
    %1 = arith.addi %0, %c0_i32 : i32
    %2 = arith.index_cast %1 : i32 to index
    %c0 = arith.constant 0 : index
    %3 = memref.load %arg1[%2, %c0] : memref<2x8xi32, #tpu.memory_space<smem>>
    %4 = arith.index_cast %3 : i32 to index
    %c0_0 = arith.constant 0 : index
    %5 = vector.load %arg2[%4, %c0_0] : memref<128x32xf32, #tpu.memory_space<vmem>>, vector<1x32xf32>
    %c0_1 = arith.constant 0 : index
    %c0_2 = arith.constant 0 : index
    %6 = vector.load %arg3[%c0_1, %c0_2] : memref<16x32xf32, #tpu.memory_space<vmem>>, vector<1x32xf32>
    %7 = arith.addf %5, %6 : vector<1x32xf32>
    %c0_3 = arith.constant 0 : index
    %c0_4 = arith.constant 0 : index
    %8 = vector.load %arg7[%c0_3, %c0_4] : memref<16x32xf32, #tpu.memory_space<vmem>>, vector<1x32xf32>
    tpu.vector_store %arg7[%c0_3, %c0_4], %7 {strides = array<i32>} : memref<16x32xf32, #tpu.memory_space<vmem>>, vector<1x32xf32>,
    %9 = arith.index_cast %1 : i32 to index
    %c1 = arith.constant 1 : index
    %10 = memref.load %arg1[%9, %c1] : memref<2x8xi32, #tpu.memory_space<smem>>
    %11 = arith.index_cast %10 : i32 to index
    %c0_5 = arith.constant 0 : index
    %12 = vector.load %arg2[%11, %c0_5] : memref<128x32xf32, #tpu.memory_space<vmem>>, vector<1x32xf32>
    %c1_6 = arith.constant 1 : index
    %c0_7 = arith.constant 0 : index
    %13 = vector.load %arg3[%c1_6, %c0_7] : memref<16x32xf32, #tpu.memory_space<vmem>>, vector<1x32xf32>
    %14 = arith.addf %12, %13 : vector<1x32xf32>
    %c1_8 = arith.constant 1 : index
    %c0_9 = arith.constant 0 : index
    %15 = vector.load %arg7[%c1_8, %c0_9] : memref<16x32xf32, #tpu.memory_space<vmem>>, vector<1x32xf32>
    tpu.vector_store %arg7[%c1_8, %c0_9], %14 {strides = array<i32>} : memref<16x32xf32, #tpu.memory_space<vmem>>, vector<1x32xf32>,
    %16 = arith.index_cast %1 : i32 to index
    %c2 = arith.constant 2 : index
    %17 = memref.load %arg1[%16, %c2] : memref<2x8xi32, #tpu.memory_space<smem>>
    %18 = arith.index_cast %17 : i32 to index
    %c0_10 = arith.constant 0 : index
    %19 = vector.load %arg2[%18, %c0_10] : memref<128x32xf32, #tpu.memory_space<vmem>>, vector<1x32xf32>
    %c2_11 = arith.constant 2 : index
    %c0_12 = arith.constant 0 : index
    %20 = vector.load %arg3[%c2_11, %c0_12] : memref<16x32xf32, #tpu.memory_space<vmem>>, vector<1x32xf32>
    %21 = arith.addf %19, %20 : vector<1x32xf32>
    %c2_13 = arith.constant 2 : index
    %c0_14 = arith.constant 0 : index
    %22 = vector.load %arg7[%c2_13, %c0_14] : memref<16x32xf32, #tpu.memory_space<vmem>>, vector<1x32xf32>
    tpu.vector_store %arg7[%c2_13, %c0_14], %21 {strides = array<i32>} : memref<16x32xf32, #tpu.memory_space<vmem>>, vector<1x32xf32>,
    %23 = arith.index_cast %1 : i32 to index
    %c3 = arith.constant 3 : index
    %24 = memref.load %arg1[%23, %c3] : memref<2x8xi32, #tpu.memory_space<smem>>
    %25 = arith.index_cast %24 : i32 to index
    %c0_15 = arith.constant 0 : index
    %26 = vector.load %arg2[%25, %c0_15] : memref<128x32xf32, #tpu.memory_space<vmem>>, vector<1x32xf32>
    %c3_16 = arith.constant 3 : index
    %c0_17 = arith.constant 0 : index
    %27 = vector.load %arg3[%c3_16, %c0_17] : memref<16x32xf32, #tpu.memory_space<vmem>>, vector<1x32xf32>
    %28 = arith.addf %26, %27 : vector<1x32xf32>
    %c3_18 = arith.constant 3 : index
    %c0_19 = arith.constant 0 : index
    %29 = vector.load %arg7[%c3_18, %c0_19] : memref<16x32xf32, #tpu.memory_space<vmem>>, vector<1x32xf32>
    tpu.vector_store %arg7[%c3_18, %c0_19], %28 {strides = array<i32>} : memref<16x32xf32, #tpu.memory_space<vmem>>, vector<1x32xf32>,
    %30 = arith.index_cast %1 : i32 to index
    %c4 = arith.constant 4 : index
    %31 = memref.load %arg1[%30, %c4] : memref<2x8xi32, #tpu.memory_space<smem>>
    %32 = arith.index_cast %31 : i32 to index
    %c0_20 = arith.constant 0 : index
    %33 = vector.load %arg2[%32, %c0_20] : memref<128x32xf32, #tpu.memory_space<vmem>>, vector<1x32xf32>
    %c4_21 = arith.constant 4 : index
    %c0_22 = arith.constant 0 : index
    %34 = vector.load %arg3[%c4_21, %c0_22] : memref<16x32xf32, #tpu.memory_space<vmem>>, vector<1x32xf32>
    %35 = arith.addf %33, %34 : vector<1x32xf32>
    %c4_23 = arith.constant 4 : index
    %c0_24 = arith.constant 0 : index
    %36 = vector.load %arg7[%c4_23, %c0_24] : memref<16x32xf32, #tpu.memory_space<vmem>>, vector<1x32xf32>
    tpu.vector_store %arg7[%c4_23, %c0_24], %35 {strides = array<i32>} : memref<16x32xf32, #tpu.memory_space<vmem>>, vector<1x32xf32>,
    %37 = arith.index_cast %1 : i32 to index
    %c5 = arith.constant 5 : index
    %38 = memref.load %arg1[%37, %c5] : memref<2x8xi32, #tpu.memory_space<smem>>
    %39 = arith.index_cast %38 : i32 to index
    %c0_25 = arith.constant 0 : index
    %40 = vector.load %arg2[%39, %c0_25] : memref<128x32xf32, #tpu.memory_space<vmem>>, vector<1x32xf32>
    %c5_26 = arith.constant 5 : index
    %c0_27 = arith.constant 0 : index
    %41 = vector.load %arg3[%c5_26, %c0_27] : memref<16x32xf32, #tpu.memory_space<vmem>>, vector<1x32xf32>
    %42 = arith.addf %40, %41 : vector<1x32xf32>
    %c5_28 = arith.constant 5 : index
    %c0_29 = arith.constant 0 : index
    %43 = vector.load %arg7[%c5_28, %c0_29] : memref<16x32xf32, #tpu.memory_space<vmem>>, vector<1x32xf32>
    tpu.vector_store %arg7[%c5_28, %c0_29], %42 {strides = array<i32>} : memref<16x32xf32, #tpu.memory_space<vmem>>, vector<1x32xf32>,
    %44 = arith.index_cast %1 : i32 to index
    %c6 = arith.constant 6 : index
    %45 = memref.load %arg1[%44, %c6] : memref<2x8xi32, #tpu.memory_space<smem>>
    %46 = arith.index_cast %45 : i32 to index
    %c0_30 = arith.constant 0 : index
    %47 = vector.load %arg2[%46, %c0_30] : memref<128x32xf32, #tpu.memory_space<vmem>>, vector<1x32xf32>
    %c6_31 = arith.constant 6 : index
    %c0_32 = arith.constant 0 : index
    %48 = vector.load %arg3[%c6_31, %c0_32] : memref<16x32xf32, #tpu.memory_space<vmem>>, vector<1x32xf32>
    %49 = arith.addf %47, %48 : vector<1x32xf32>
    %c6_33 = arith.constant 6 : index
    %c0_34 = arith.constant 0 : index
    %50 = vector.load %arg7[%c6_33, %c0_34] : memref<16x32xf32, #tpu.memory_space<vmem>>, vector<1x32xf32>
    tpu.vector_store %arg7[%c6_33, %c0_34], %49 {strides = array<i32>} : memref<16x32xf32, #tpu.memory_space<vmem>>, vector<1x32xf32>,
    %51 = arith.index_cast %1 : i32 to index
    %c7 = arith.constant 7 : index
    %52 = memref.load %arg1[%51, %c7] : memref<2x8xi32, #tpu.memory_space<smem>>
    %53 = arith.index_cast %52 : i32 to index
    %c0_35 = arith.constant 0 : index
    %54 = vector.load %arg2[%53, %c0_35] : memref<128x32xf32, #tpu.memory_space<vmem>>, vector<1x32xf32>
    %c7_36 = arith.constant 7 : index
    %c0_37 = arith.constant 0 : index
    %55 = vector.load %arg3[%c7_36, %c0_37] : memref<16x32xf32, #tpu.memory_space<vmem>>, vector<1x32xf32>
    %56 = arith.addf %54, %55 : vector<1x32xf32>
    %c7_38 = arith.constant 7 : index
    %c0_39 = arith.constant 0 : index
    %57 = vector.load %arg7[%c7_38, %c0_39] : memref<16x32xf32, #tpu.memory_space<vmem>>, vector<1x32xf32>
    tpu.vector_store %arg7[%c7_38, %c0_39], %56 {strides = array<i32>} : memref<16x32xf32, #tpu.memory_space<vmem>>, vector<1x32xf32>,
    %c2_i32_40 = arith.constant 2 : i32
    %58 = arith.muli %arg0, %c2_i32_40 : i32
    %c1_i32 = arith.constant 1 : i32
    %59 = arith.addi %58, %c1_i32 : i32
    %60 = arith.index_cast %59 : i32 to index
    %c0_41 = arith.constant 0 : index
    %61 = memref.load %arg1[%60, %c0_41] : memref<2x8xi32, #tpu.memory_space<smem>>
    %62 = arith.index_cast %61 : i32 to index
    %c0_42 = arith.constant 0 : index
    %63 = vector.load %arg2[%62, %c0_42] : memref<128x32xf32, #tpu.memory_space<vmem>>, vector<1x32xf32>
    %c0_43 = arith.constant 0 : index
    %c0_44 = arith.constant 0 : index
    %64 = vector.load %arg3[%c0_43, %c0_44] : memref<16x32xf32, #tpu.memory_space<vmem>>, vector<1x32xf32>
    %65 = arith.addf %63, %64 : vector<1x32xf32>
    %c8 = arith.constant 8 : index
    %c0_45 = arith.constant 0 : index
    %66 = vector.load %arg7[%c8, %c0_45] : memref<16x32xf32, #tpu.memory_space<vmem>>, vector<1x32xf32>
    tpu.vector_store %arg7[%c8, %c0_45], %65 {strides = array<i32>} : memref<16x32xf32, #tpu.memory_space<vmem>>, vector<1x32xf32>,
    %67 = arith.index_cast %59 : i32 to index
    %c1_46 = arith.constant 1 : index
    %68 = memref.load %arg1[%67, %c1_46] : memref<2x8xi32, #tpu.memory_space<smem>>
    %69 = arith.index_cast %68 : i32 to index
    %c0_47 = arith.constant 0 : index
    %70 = vector.load %arg2[%69, %c0_47] : memref<128x32xf32, #tpu.memory_space<vmem>>, vector<1x32xf32>
    %c1_48 = arith.constant 1 : index
    %c0_49 = arith.constant 0 : index
    %71 = vector.load %arg3[%c1_48, %c0_49] : memref<16x32xf32, #tpu.memory_space<vmem>>, vector<1x32xf32>
    %72 = arith.addf %70, %71 : vector<1x32xf32>
    %c9 = arith.constant 9 : index
    %c0_50 = arith.constant 0 : index
    %73 = vector.load %arg7[%c9, %c0_50] : memref<16x32xf32, #tpu.memory_space<vmem>>, vector<1x32xf32>
    tpu.vector_store %arg7[%c9, %c0_50], %72 {strides = array<i32>} : memref<16x32xf32, #tpu.memory_space<vmem>>, vector<1x32xf32>,
    %74 = arith.index_cast %59 : i32 to index
    %c2_51 = arith.constant 2 : index
    %75 = memref.load %arg1[%74, %c2_51] : memref<2x8xi32, #tpu.memory_space<smem>>
    %76 = arith.index_cast %75 : i32 to index
    %c0_52 = arith.constant 0 : index
    %77 = vector.load %arg2[%76, %c0_52] : memref<128x32xf32, #tpu.memory_space<vmem>>, vector<1x32xf32>
    %c2_53 = arith.constant 2 : index
    %c0_54 = arith.constant 0 : index
    %78 = vector.load %arg3[%c2_53, %c0_54] : memref<16x32xf32, #tpu.memory_space<vmem>>, vector<1x32xf32>
    %79 = arith.addf %77, %78 : vector<1x32xf32>
    %c10 = arith.constant 10 : index
    %c0_55 = arith.constant 0 : index
    %80 = vector.load %arg7[%c10, %c0_55] : memref<16x32xf32, #tpu.memory_space<vmem>>, vector<1x32xf32>
    tpu.vector_store %arg7[%c10, %c0_55], %79 {strides = array<i32>} : memref<16x32xf32, #tpu.memory_space<vmem>>, vector<1x32xf32>,
    %81 = arith.index_cast %59 : i32 to index
    %c3_56 = arith.constant 3 : index
    %82 = memref.load %arg1[%81, %c3_56] : memref<2x8xi32, #tpu.memory_space<smem>>
    %83 = arith.index_cast %82 : i32 to index
    %c0_57 = arith.constant 0 : index
    %84 = vector.load %arg2[%83, %c0_57] : memref<128x32xf32, #tpu.memory_space<vmem>>, vector<1x32xf32>
    %c3_58 = arith.constant 3 : index
    %c0_59 = arith.constant 0 : index
    %85 = vector.load %arg3[%c3_58, %c0_59] : memref<16x32xf32, #tpu.memory_space<vmem>>, vector<1x32xf32>
    %86 = arith.addf %84, %85 : vector<1x32xf32>
    %c11 = arith.constant 11 : index
    %c0_60 = arith.constant 0 : index
    %87 = vector.load %arg7[%c11, %c0_60] : memref<16x32xf32, #tpu.memory_space<vmem>>, vector<1x32xf32>
    tpu.vector_store %arg7[%c11, %c0_60], %86 {strides = array<i32>} : memref<16x32xf32, #tpu.memory_space<vmem>>, vector<1x32xf32>,
    %88 = arith.index_cast %59 : i32 to index
    %c4_61 = arith.constant 4 : index
    %89 = memref.load %arg1[%88, %c4_61] : memref<2x8xi32, #tpu.memory_space<smem>>
    %90 = arith.index_cast %89 : i32 to index
    %c0_62 = arith.constant 0 : index
    %91 = vector.load %arg2[%90, %c0_62] : memref<128x32xf32, #tpu.memory_space<vmem>>, vector<1x32xf32>
    %c4_63 = arith.constant 4 : index
    %c0_64 = arith.constant 0 : index
    %92 = vector.load %arg3[%c4_63, %c0_64] : memref<16x32xf32, #tpu.memory_space<vmem>>, vector<1x32xf32>
    %93 = arith.addf %91, %92 : vector<1x32xf32>
    %c12 = arith.constant 12 : index
    %c0_65 = arith.constant 0 : index
    %94 = vector.load %arg7[%c12, %c0_65] : memref<16x32xf32, #tpu.memory_space<vmem>>, vector<1x32xf32>
    tpu.vector_store %arg7[%c12, %c0_65], %93 {strides = array<i32>} : memref<16x32xf32, #tpu.memory_space<vmem>>, vector<1x32xf32>,
    %95 = arith.index_cast %59 : i32 to index
    %c5_66 = arith.constant 5 : index
    %96 = memref.load %arg1[%95, %c5_66] : memref<2x8xi32, #tpu.memory_space<smem>>
    %97 = arith.index_cast %96 : i32 to index
    %c0_67 = arith.constant 0 : index
    %98 = vector.load %arg2[%97, %c0_67] : memref<128x32xf32, #tpu.memory_space<vmem>>, vector<1x32xf32>
    %c5_68 = arith.constant 5 : index
    %c0_69 = arith.constant 0 : index
    %99 = vector.load %arg3[%c5_68, %c0_69] : memref<16x32xf32, #tpu.memory_space<vmem>>, vector<1x32xf32>
    %100 = arith.addf %98, %99 : vector<1x32xf32>
    %c13 = arith.constant 13 : index
    %c0_70 = arith.constant 0 : index
    %101 = vector.load %arg7[%c13, %c0_70] : memref<16x32xf32, #tpu.memory_space<vmem>>, vector<1x32xf32>
    tpu.vector_store %arg7[%c13, %c0_70], %100 {strides = array<i32>} : memref<16x32xf32, #tpu.memory_space<vmem>>, vector<1x32xf32>,
    %102 = arith.index_cast %59 : i32 to index
    %c6_71 = arith.constant 6 : index
    %103 = memref.load %arg1[%102, %c6_71] : memref<2x8xi32, #tpu.memory_space<smem>>
    %104 = arith.index_cast %103 : i32 to index
    %c0_72 = arith.constant 0 : index
    %105 = vector.load %arg2[%104, %c0_72] : memref<128x32xf32, #tpu.memory_space<vmem>>, vector<1x32xf32>
    %c6_73 = arith.constant 6 : index
    %c0_74 = arith.constant 0 : index
    %106 = vector.load %arg3[%c6_73, %c0_74] : memref<16x32xf32, #tpu.memory_space<vmem>>, vector<1x32xf32>
    %107 = arith.addf %105, %106 : vector<1x32xf32>
    %c14 = arith.constant 14 : index
    %c0_75 = arith.constant 0 : index
    %108 = vector.load %arg7[%c14, %c0_75] : memref<16x32xf32, #tpu.memory_space<vmem>>, vector<1x32xf32>
    tpu.vector_store %arg7[%c14, %c0_75], %107 {strides = array<i32>} : memref<16x32xf32, #tpu.memory_space<vmem>>, vector<1x32xf32>,
    %109 = arith.index_cast %59 : i32 to index
    %c7_76 = arith.constant 7 : index
    %110 = memref.load %arg1[%109, %c7_76] : memref<2x8xi32, #tpu.memory_space<smem>>
    %111 = arith.index_cast %110 : i32 to index
    %c0_77 = arith.constant 0 : index
    %112 = vector.load %arg2[%111, %c0_77] : memref<128x32xf32, #tpu.memory_space<vmem>>, vector<1x32xf32>
    %c7_78 = arith.constant 7 : index
    %c0_79 = arith.constant 0 : index
    %113 = vector.load %arg3[%c7_78, %c0_79] : memref<16x32xf32, #tpu.memory_space<vmem>>, vector<1x32xf32>
    %114 = arith.addf %112, %113 : vector<1x32xf32>
    %c15 = arith.constant 15 : index
    %c0_80 = arith.constant 0 : index
    %115 = vector.load %arg7[%c15, %c0_80] : memref<16x32xf32, #tpu.memory_space<vmem>>, vector<1x32xf32>
    tpu.vector_store %arg7[%c15, %c0_80], %114 {strides = array<i32>} : memref<16x32xf32, #tpu.memory_space<vmem>>, vector<1x32xf32>,
    %c0_81 = arith.constant 0 : index
    %c0_82 = arith.constant 0 : index
    %116 = vector.load %arg7[%c0_81, %c0_82] : memref<16x32xf32, #tpu.memory_space<vmem>>, vector<16x32xf32>
    %117 = tpu.iota {dimensions = array<i32: 0>} : vector<8x8xi32>
    %118 = tpu.iota {dimensions = array<i32: 1>} : vector<8x8xi32>
    %119 = arith.cmpi sge, %117, %118 : vector<8x8xi32>
    %cst = arith.constant 0.000000e+00 : f32
    %cst_83 = arith.constant -1.000000e+30 : f32
    %120 = vector.broadcast %cst : f32 to vector<8x8xf32>
    %121 = vector.broadcast %cst_83 : f32 to vector<8x8xf32>
    %122 = arith.select %119, %120, %121 : vector<8x8xi1>, vector<8x8xf32>
    %c0_84 = arith.constant 0 : index
    %c0_85 = arith.constant 0 : index
    %123 = vector.load %arg4[%c0_84, %c0_85] : memref<480x128xbf16, #tpu.memory_space<vmem>>, vector<32x128xbf16>
    %c32 = arith.constant 32 : index
    %c0_86 = arith.constant 0 : index
    %124 = vector.load %arg4[%c32, %c0_86] : memref<480x128xbf16, #tpu.memory_space<vmem>>, vector<32x128xbf16>
    %c64 = arith.constant 64 : index
    %c0_87 = arith.constant 0 : index
    %125 = vector.load %arg4[%c64, %c0_87] : memref<480x128xbf16, #tpu.memory_space<vmem>>, vector<32x128xbf16>
    %c96 = arith.constant 96 : index
    %c0_88 = arith.constant 0 : index
    %126 = vector.load %arg4[%c96, %c0_88] : memref<480x128xbf16, #tpu.memory_space<vmem>>, vector<128x128xbf16>
    %c0_89 = arith.constant 0 : index
    %c0_90 = arith.constant 0 : index
    %127 = vector.load %arg5[%c0_89, %c0_90] : memref<18x128xf32, #tpu.memory_space<vmem>>, vector<1x32xf32>
    %c1_91 = arith.constant 1 : index
    %c0_92 = arith.constant 0 : index
    %128 = vector.load %arg5[%c1_91, %c0_92] : memref<18x128xf32, #tpu.memory_space<vmem>>, vector<1x32xf32>
    %c2_93 = arith.constant 2 : index
    %c0_94 = arith.constant 0 : index
    %129 = vector.load %arg5[%c2_93, %c0_94] : memref<18x128xf32, #tpu.memory_space<vmem>>, vector<1x128xf32>
    %c3_95 = arith.constant 3 : index
    %c0_96 = arith.constant 0 : index
    %130 = vector.load %arg5[%c3_95, %c0_96] : memref<18x128xf32, #tpu.memory_space<vmem>>, vector<1x32xf32>
    %c4_97 = arith.constant 4 : index
    %c0_98 = arith.constant 0 : index
    %131 = vector.load %arg5[%c4_97, %c0_98] : memref<18x128xf32, #tpu.memory_space<vmem>>, vector<1x32xf32>
    %c5_99 = arith.constant 5 : index
    %c0_100 = arith.constant 0 : index
    %132 = vector.load %arg5[%c5_99, %c0_100] : memref<18x128xf32, #tpu.memory_space<vmem>>, vector<1x32xf32>
    %c6_101 = arith.constant 6 : index
    %c0_102 = arith.constant 0 : index
    %133 = vector.load %arg5[%c6_101, %c0_102] : memref<18x128xf32, #tpu.memory_space<vmem>>, vector<1x128xf32>
    %c7_103 = arith.constant 7 : index
    %c0_104 = arith.constant 0 : index
    %134 = vector.load %arg5[%c7_103, %c0_104] : memref<18x128xf32, #tpu.memory_space<vmem>>, vector<1x32xf32>
    %cst_105 = arith.constant dense<0.000000e+00> : vector<16xf32>
    %135 = vector.multi_reduction <add>, %116, %cst_105 [1] : vector<16x32xf32> to vector<16xf32>
    %136 = vector.shape_cast %135 : vector<16xf32> to vector<16x1xf32>
    %cst_106 = arith.constant 3.200000e+01 : f32
    %137 = vector.broadcast %cst_106 : f32 to vector<16x1xf32>
    %138 = arith.divf %136, %137 : vector<16x1xf32>
    %139 = vector.broadcast %138 : vector<16x1xf32> to vector<16x32xf32>
    %140 = arith.subf %116, %139 : vector<16x32xf32>
    %141 = arith.mulf %140, %140 : vector<16x32xf32>
    %cst_107 = arith.constant dense<0.000000e+00> : vector<16xf32>
    %142 = vector.multi_reduction <add>, %141, %cst_107 [1] : vector<16x32xf32> to vector<16xf32>
    %143 = vector.shape_cast %142 : vector<16xf32> to vector<16x1xf32>
    %cst_108 = arith.constant 3.200000e+01 : f32
    %144 = vector.broadcast %cst_108 : f32 to vector<16x1xf32>
    %145 = arith.divf %143, %144 : vector<16x1xf32>
    %146 = vector.broadcast %138 : vector<16x1xf32> to vector<16x32xf32>
    %147 = arith.subf %116, %146 : vector<16x32xf32>
    %cst_109 = arith.constant 9.99999974E-6 : f32
    %148 = vector.broadcast %cst_109 : f32 to vector<16x1xf32>
    %149 = arith.addf %145, %148 : vector<16x1xf32>
    %150 = math.rsqrt %149 : vector<16x1xf32>
    %151 = vector.broadcast %150 : vector<16x1xf32> to vector<16x32xf32>
    %152 = arith.mulf %147, %151 : vector<16x32xf32>
    %153 = vector.broadcast %127 : vector<1x32xf32> to vector<16x32xf32>
    %154 = arith.mulf %152, %153 : vector<16x32xf32>
    %155 = vector.broadcast %128 : vector<1x32xf32> to vector<16x32xf32>
    %156 = arith.addf %154, %155 : vector<16x32xf32>
    %157 = arith.truncf %156 : vector<16x32xf32> to vector<16x32xbf16>
    %cst_110 = arith.constant dense<0.000000e+00> : vector<16x128xf32>
    %158 = tpu.matmul %157, %123, %cst_110 {dimension_numbers = #tpu.dot_dimension_numbers<[1], [0], [0], [1], [0, 0, 1, 1], [], []>} : vector<16x32xbf16>, vector<32x128xbf16>, vector<16x128xf32> -> vector<16x128xf32>
    %159 = vector.broadcast %129 : vector<1x128xf32> to vector<16x128xf32>
    %160 = arith.addf %158, %159 : vector<16x128xf32>
    %161 = arith.truncf %160 : vector<16x128xf32> to vector<16x128xbf16>
    %cst_111 = arith.constant 0.000000e+00 : f32
    %162 = vector.broadcast %cst_111 : f32 to vector<16x128xf32>
    %163 = vector.extract_strided_slice %161 {offsets = [0, 0], sizes = [8, 16], strides = [1, 1]} : vector<16x128xbf16> to vector<8x16xbf16>
    %164 = vector.extract_strided_slice %161 {offsets = [0, 32], sizes = [8, 16], strides = [1, 1]} : vector<16x128xbf16> to vector<8x16xbf16>
    %165 = vector.extract_strided_slice %161 {offsets = [0, 64], sizes = [8, 16], strides = [1, 1]} : vector<16x128xbf16> to vector<8x16xbf16>
    %cst_112 = arith.constant dense<0.000000e+00> : vector<8x8xf32>
    %166 = tpu.matmul %163, %164, %cst_112 {dimension_numbers = #tpu.dot_dimension_numbers<[1], [1], [0], [0], [0, 0, 1, 0], [], []>} : vector<8x16xbf16>, vector<8x16xbf16>, vector<8x8xf32> -> vector<8x8xf32>
    %cst_113 = arith.constant 2.500000e-01 : f32
    %167 = vector.broadcast %cst_113 : f32 to vector<8x8xf32>
    %168 = arith.mulf %166, %167 : vector<8x8xf32>
    %169 = arith.addf %168, %122 : vector<8x8xf32>
    %cst_114 = arith.constant dense<0xFF800000> : vector<8xf32>
    %170 = vector.multi_reduction <maximumf>, %169, %cst_114 [1] : vector<8x8xf32> to vector<8xf32>
    %171 = vector.shape_cast %170 : vector<8xf32> to vector<8x1xf32>
    %172 = vector.broadcast %171 : vector<8x1xf32> to vector<8x8xf32>
    %173 = arith.subf %169, %172 : vector<8x8xf32>
    %174 = math.exp %173 : vector<8x8xf32>
    %cst_115 = arith.constant dense<0.000000e+00> : vector<8xf32>
    %175 = vector.multi_reduction <add>, %174, %cst_115 [1] : vector<8x8xf32> to vector<8xf32>
    %176 = vector.shape_cast %175 : vector<8xf32> to vector<8x1xf32>
    %177 = tpu.reciprocal %176 {approx = true} : vector<8x1xf32> -> vector<8x1xf32>
    %178 = vector.broadcast %177 : vector<8x1xf32> to vector<8x8xf32>
    %179 = arith.mulf %174, %178 : vector<8x8xf32>
    %180 = arith.truncf %179 : vector<8x8xf32> to vector<8x8xbf16>
    %cst_116 = arith.constant dense<0.000000e+00> : vector<8x16xf32>
    %181 = tpu.matmul %180, %165, %cst_116 {dimension_numbers = #tpu.dot_dimension_numbers<[1], [0], [0], [1], [0, 0, 1, 1], [], []>} : vector<8x8xbf16>, vector<8x16xbf16>, vector<8x16xf32> -> vector<8x16xf32>
    %182 = vector.extract_strided_slice %161 {offsets = [8, 0], sizes = [8, 16], strides = [1, 1]} : vector<16x128xbf16> to vector<8x16xbf16>
    %183 = vector.extract_strided_slice %161 {offsets = [8, 32], sizes = [8, 16], strides = [1, 1]} : vector<16x128xbf16> to vector<8x16xbf16>
    %184 = vector.extract_strided_slice %161 {offsets = [8, 64], sizes = [8, 16], strides = [1, 1]} : vector<16x128xbf16> to vector<8x16xbf16>
    %cst_117 = arith.constant dense<0.000000e+00> : vector<8x8xf32>
    %185 = tpu.matmul %182, %183, %cst_117 {dimension_numbers = #tpu.dot_dimension_numbers<[1], [1], [0], [0], [0, 0, 1, 0], [], []>} : vector<8x16xbf16>, vector<8x16xbf16>, vector<8x8xf32> -> vector<8x8xf32>
    %cst_118 = arith.constant 2.500000e-01 : f32
    %186 = vector.broadcast %cst_118 : f32 to vector<8x8xf32>
    %187 = arith.mulf %185, %186 : vector<8x8xf32>
    %188 = arith.addf %187, %122 : vector<8x8xf32>
    %cst_119 = arith.constant dense<0xFF800000> : vector<8xf32>
    %189 = vector.multi_reduction <maximumf>, %188, %cst_119 [1] : vector<8x8xf32> to vector<8xf32>
    %190 = vector.shape_cast %189 : vector<8xf32> to vector<8x1xf32>
    %191 = vector.broadcast %190 : vector<8x1xf32> to vector<8x8xf32>
    %192 = arith.subf %188, %191 : vector<8x8xf32>
    %193 = math.exp %192 : vector<8x8xf32>
    %cst_120 = arith.constant dense<0.000000e+00> : vector<8xf32>
    %194 = vector.multi_reduction <add>, %193, %cst_120 [1] : vector<8x8xf32> to vector<8xf32>
    %195 = vector.shape_cast %194 : vector<8xf32> to vector<8x1xf32>
    %196 = tpu.reciprocal %195 {approx = true} : vector<8x1xf32> -> vector<8x1xf32>
    %197 = vector.broadcast %196 : vector<8x1xf32> to vector<8x8xf32>
    %198 = arith.mulf %193, %197 : vector<8x8xf32>
    %199 = arith.truncf %198 : vector<8x8xf32> to vector<8x8xbf16>
    %cst_121 = arith.constant dense<0.000000e+00> : vector<8x16xf32>
    %200 = tpu.matmul %199, %184, %cst_121 {dimension_numbers = #tpu.dot_dimension_numbers<[1], [0], [0], [1], [0, 0, 1, 1], [], []>} : vector<8x8xbf16>, vector<8x16xbf16>, vector<8x16xf32> -> vector<8x16xf32>
    %201 = tpu.concatenate %181, %200 in 0 : vector<8x16xf32>, vector<8x16xf32> -> vector<16x16xf32>
    %202 = arith.truncf %201 : vector<16x16xf32> to vector<16x16xbf16>
    %203 = vector.extract_strided_slice %124 {offsets = [0, 0], sizes = [16, 128], strides = [1, 1]} : vector<32x128xbf16> to vector<16x128xbf16>
    %cst_122 = arith.constant dense<0.000000e+00> : vector<16x128xf32>
    %204 = tpu.matmul %202, %203, %cst_122 {dimension_numbers = #tpu.dot_dimension_numbers<[1], [0], [0], [1], [0, 0, 1, 1], [], []>} : vector<16x16xbf16>, vector<16x128xbf16>, vector<16x128xf32> -> vector<16x128xf32>
    %205 = arith.addf %162, %204 : vector<16x128xf32>
    %206 = vector.extract_strided_slice %161 {offsets = [0, 16], sizes = [8, 16], strides = [1, 1]} : vector<16x128xbf16> to vector<8x16xbf16>
    %207 = vector.extract_strided_slice %161 {offsets = [0, 48], sizes = [8, 16], strides = [1, 1]} : vector<16x128xbf16> to vector<8x16xbf16>
    %208 = vector.extract_strided_slice %161 {offsets = [0, 80], sizes = [8, 16], strides = [1, 1]} : vector<16x128xbf16> to vector<8x16xbf16>
    %cst_123 = arith.constant dense<0.000000e+00> : vector<8x8xf32>
    %209 = tpu.matmul %206, %207, %cst_123 {dimension_numbers = #tpu.dot_dimension_numbers<[1], [1], [0], [0], [0, 0, 1, 0], [], []>} : vector<8x16xbf16>, vector<8x16xbf16>, vector<8x8xf32> -> vector<8x8xf32>
    %cst_124 = arith.constant 2.500000e-01 : f32
    %210 = vector.broadcast %cst_124 : f32 to vector<8x8xf32>
    %211 = arith.mulf %209, %210 : vector<8x8xf32>
    %212 = arith.addf %211, %122 : vector<8x8xf32>
    %cst_125 = arith.constant dense<0xFF800000> : vector<8xf32>
    %213 = vector.multi_reduction <maximumf>, %212, %cst_125 [1] : vector<8x8xf32> to vector<8xf32>
    %214 = vector.shape_cast %213 : vector<8xf32> to vector<8x1xf32>
    %215 = vector.broadcast %214 : vector<8x1xf32> to vector<8x8xf32>
    %216 = arith.subf %212, %215 : vector<8x8xf32>
    %217 = math.exp %216 : vector<8x8xf32>
    %cst_126 = arith.constant dense<0.000000e+00> : vector<8xf32>
    %218 = vector.multi_reduction <add>, %217, %cst_126 [1] : vector<8x8xf32> to vector<8xf32>
    %219 = vector.shape_cast %218 : vector<8xf32> to vector<8x1xf32>
    %220 = tpu.reciprocal %219 {approx = true} : vector<8x1xf32> -> vector<8x1xf32>
    %221 = vector.broadcast %220 : vector<8x1xf32> to vector<8x8xf32>
    %222 = arith.mulf %217, %221 : vector<8x8xf32>
    %223 = arith.truncf %222 : vector<8x8xf32> to vector<8x8xbf16>
    %cst_127 = arith.constant dense<0.000000e+00> : vector<8x16xf32>
    %224 = tpu.matmul %223, %208, %cst_127 {dimension_numbers = #tpu.dot_dimension_numbers<[1], [0], [0], [1], [0, 0, 1, 1], [], []>} : vector<8x8xbf16>, vector<8x16xbf16>, vector<8x16xf32> -> vector<8x16xf32>
    %225 = vector.extract_strided_slice %161 {offsets = [8, 16], sizes = [8, 16], strides = [1, 1]} : vector<16x128xbf16> to vector<8x16xbf16>
    %226 = vector.extract_strided_slice %161 {offsets = [8, 48], sizes = [8, 16], strides = [1, 1]} : vector<16x128xbf16> to vector<8x16xbf16>
    %227 = vector.extract_strided_slice %161 {offsets = [8, 80], sizes = [8, 16], strides = [1, 1]} : vector<16x128xbf16> to vector<8x16xbf16>
    %cst_128 = arith.constant dense<0.000000e+00> : vector<8x8xf32>
    %228 = tpu.matmul %225, %226, %cst_128 {dimension_numbers = #tpu.dot_dimension_numbers<[1], [1], [0], [0], [0, 0, 1, 0], [], []>} : vector<8x16xbf16>, vector<8x16xbf16>, vector<8x8xf32> -> vector<8x8xf32>
    %cst_129 = arith.constant 2.500000e-01 : f32
    %229 = vector.broadcast %cst_129 : f32 to vector<8x8xf32>
    %230 = arith.mulf %228, %229 : vector<8x8xf32>
    %231 = arith.addf %230, %122 : vector<8x8xf32>
    %cst_130 = arith.constant dense<0xFF800000> : vector<8xf32>
    %232 = vector.multi_reduction <maximumf>, %231, %cst_130 [1] : vector<8x8xf32> to vector<8xf32>
    %233 = vector.shape_cast %232 : vector<8xf32> to vector<8x1xf32>
    %234 = vector.broadcast %233 : vector<8x1xf32> to vector<8x8xf32>
    %235 = arith.subf %231, %234 : vector<8x8xf32>
    %236 = math.exp %235 : vector<8x8xf32>
    %cst_131 = arith.constant dense<0.000000e+00> : vector<8xf32>
    %237 = vector.multi_reduction <add>, %236, %cst_131 [1] : vector<8x8xf32> to vector<8xf32>
    %238 = vector.shape_cast %237 : vector<8xf32> to vector<8x1xf32>
    %239 = tpu.reciprocal %238 {approx = true} : vector<8x1xf32> -> vector<8x1xf32>
    %240 = vector.broadcast %239 : vector<8x1xf32> to vector<8x8xf32>
    %241 = arith.mulf %236, %240 : vector<8x8xf32>
    %242 = arith.truncf %241 : vector<8x8xf32> to vector<8x8xbf16>
    %cst_132 = arith.constant dense<0.000000e+00> : vector<8x16xf32>
    %243 = tpu.matmul %242, %227, %cst_132 {dimension_numbers = #tpu.dot_dimension_numbers<[1], [0], [0], [1], [0, 0, 1, 1], [], []>} : vector<8x8xbf16>, vector<8x16xbf16>, vector<8x16xf32> -> vector<8x16xf32>
    %244 = tpu.concatenate %224, %243 in 0 : vector<8x16xf32>, vector<8x16xf32> -> vector<16x16xf32>
    %245 = arith.truncf %244 : vector<16x16xf32> to vector<16x16xbf16>
    %246 = vector.extract_strided_slice %124 {offsets = [16, 0], sizes = [16, 128], strides = [1, 1]} : vector<32x128xbf16> to vector<16x128xbf16>
    %cst_133 = arith.constant dense<0.000000e+00> : vector<16x128xf32>
    %247 = tpu.matmul %245, %246, %cst_133 {dimension_numbers = #tpu.dot_dimension_numbers<[1], [0], [0], [1], [0, 0, 1, 1], [], []>} : vector<16x16xbf16>, vector<16x128xbf16>, vector<16x128xf32> -> vector<16x128xf32>
    %248 = arith.addf %205, %247 : vector<16x128xf32>
    %249 = vector.extract_strided_slice %248 {offsets = [0, 0], sizes = [16, 32], strides = [1, 1]} : vector<16x128xf32> to vector<16x32xf32>
    %250 = arith.addf %116, %249 : vector<16x32xf32>
    %251 = vector.broadcast %130 : vector<1x32xf32> to vector<16x32xf32>
    %252 = arith.addf %250, %251 : vector<16x32xf32>
    %cst_134 = arith.constant dense<0.000000e+00> : vector<16xf32>
    %253 = vector.multi_reduction <add>, %252, %cst_134 [1] : vector<16x32xf32> to vector<16xf32>
    %254 = vector.shape_cast %253 : vector<16xf32> to vector<16x1xf32>
    %cst_135 = arith.constant 3.200000e+01 : f32
    %255 = vector.broadcast %cst_135 : f32 to vector<16x1xf32>
    %256 = arith.divf %254, %255 : vector<16x1xf32>
    %257 = vector.broadcast %256 : vector<16x1xf32> to vector<16x32xf32>
    %258 = arith.subf %252, %257 : vector<16x32xf32>
    %259 = arith.mulf %258, %258 : vector<16x32xf32>
    %cst_136 = arith.constant dense<0.000000e+00> : vector<16xf32>
    %260 = vector.multi_reduction <add>, %259, %cst_136 [1] : vector<16x32xf32> to vector<16xf32>
    %261 = vector.shape_cast %260 : vector<16xf32> to vector<16x1xf32>
    %cst_137 = arith.constant 3.200000e+01 : f32
    %262 = vector.broadcast %cst_137 : f32 to vector<16x1xf32>
    %263 = arith.divf %261, %262 : vector<16x1xf32>
    %264 = vector.broadcast %256 : vector<16x1xf32> to vector<16x32xf32>
    %265 = arith.subf %252, %264 : vector<16x32xf32>
    %cst_138 = arith.constant 9.99999974E-6 : f32
    %266 = vector.broadcast %cst_138 : f32 to vector<16x1xf32>
    %267 = arith.addf %263, %266 : vector<16x1xf32>
    %268 = math.rsqrt %267 : vector<16x1xf32>
    %269 = vector.broadcast %268 : vector<16x1xf32> to vector<16x32xf32>
    %270 = arith.mulf %265, %269 : vector<16x32xf32>
    %271 = vector.broadcast %131 : vector<1x32xf32> to vector<16x32xf32>
    %272 = arith.mulf %270, %271 : vector<16x32xf32>
    %273 = vector.broadcast %132 : vector<1x32xf32> to vector<16x32xf32>
    %274 = arith.addf %272, %273 : vector<16x32xf32>
    %275 = arith.truncf %274 : vector<16x32xf32> to vector<16x32xbf16>
    %cst_139 = arith.constant dense<0.000000e+00> : vector<16x128xf32>
    %276 = tpu.matmul %275, %125, %cst_139 {dimension_numbers = #tpu.dot_dimension_numbers<[1], [0], [0], [1], [0, 0, 1, 1], [], []>} : vector<16x32xbf16>, vector<32x128xbf16>, vector<16x128xf32> -> vector<16x128xf32>
    %277 = vector.broadcast %133 : vector<1x128xf32> to vector<16x128xf32>
    %278 = arith.addf %276, %277 : vector<16x128xf32>
    %cst_140 = arith.constant 5.000000e-01 : f32
    %279 = vector.broadcast %cst_140 : f32 to vector<16x128xf32>
    %280 = arith.mulf %279, %278 : vector<16x128xf32>
    %cst_141 = arith.constant 4.471500e-02 : f32
    %281 = vector.broadcast %cst_141 : f32 to vector<16x128xf32>
    %282 = arith.mulf %281, %278 : vector<16x128xf32>
    %283 = arith.mulf %282, %278 : vector<16x128xf32>
    %284 = arith.mulf %283, %278 : vector<16x128xf32>
    %285 = arith.addf %278, %284 : vector<16x128xf32>
    %cst_142 = arith.constant 0.797884583 : f32
    %286 = vector.broadcast %cst_142 : f32 to vector<16x128xf32>
    %287 = arith.mulf %286, %285 : vector<16x128xf32>
    %288 = math.tanh %287 : vector<16x128xf32>
    %cst_143 = arith.constant 1.000000e+00 : f32
    %289 = vector.broadcast %cst_143 : f32 to vector<16x128xf32>
    %290 = arith.addf %289, %288 : vector<16x128xf32>
    %291 = arith.mulf %280, %290 : vector<16x128xf32>
    %292 = arith.truncf %291 : vector<16x128xf32> to vector<16x128xbf16>
    %cst_144 = arith.constant dense<0.000000e+00> : vector<16x128xf32>
    %293 = tpu.matmul %292, %126, %cst_144 {dimension_numbers = #tpu.dot_dimension_numbers<[1], [0], [0], [1], [0, 0, 1, 1], [], []>} : vector<16x128xbf16>, vector<128x128xbf16>, vector<16x128xf32> -> vector<16x128xf32>
    %294 = vector.extract_strided_slice %293 {offsets = [0, 0], sizes = [16, 32], strides = [1, 1]} : vector<16x128xf32> to vector<16x32xf32>
    %295 = arith.addf %252, %294 : vector<16x32xf32>
    %296 = vector.broadcast %134 : vector<1x32xf32> to vector<16x32xf32>
    %297 = arith.addf %295, %296 : vector<16x32xf32>
    %c224 = arith.constant 224 : index
    %c0_145 = arith.constant 0 : index
    %298 = vector.load %arg4[%c224, %c0_145] : memref<480x128xbf16, #tpu.memory_space<vmem>>, vector<32x128xbf16>
    %c256 = arith.constant 256 : index
    %c0_146 = arith.constant 0 : index
    %299 = vector.load %arg4[%c256, %c0_146] : memref<480x128xbf16, #tpu.memory_space<vmem>>, vector<32x128xbf16>
    %c288 = arith.constant 288 : index
    %c0_147 = arith.constant 0 : index
    %300 = vector.load %arg4[%c288, %c0_147] : memref<480x128xbf16, #tpu.memory_space<vmem>>, vector<32x128xbf16>
    %c320 = arith.constant 320 : index
    %c0_148 = arith.constant 0 : index
    %301 = vector.load %arg4[%c320, %c0_148] : memref<480x128xbf16, #tpu.memory_space<vmem>>, vector<128x128xbf16>
    %c8_149 = arith.constant 8 : index
    %c0_150 = arith.constant 0 : index
    %302 = vector.load %arg5[%c8_149, %c0_150] : memref<18x128xf32, #tpu.memory_space<vmem>>, vector<1x32xf32>
    %c9_151 = arith.constant 9 : index
    %c0_152 = arith.constant 0 : index
    %303 = vector.load %arg5[%c9_151, %c0_152] : memref<18x128xf32, #tpu.memory_space<vmem>>, vector<1x32xf32>
    %c10_153 = arith.constant 10 : index
    %c0_154 = arith.constant 0 : index
    %304 = vector.load %arg5[%c10_153, %c0_154] : memref<18x128xf32, #tpu.memory_space<vmem>>, vector<1x128xf32>
    %c11_155 = arith.constant 11 : index
    %c0_156 = arith.constant 0 : index
    %305 = vector.load %arg5[%c11_155, %c0_156] : memref<18x128xf32, #tpu.memory_space<vmem>>, vector<1x32xf32>
    %c12_157 = arith.constant 12 : index
    %c0_158 = arith.constant 0 : index
    %306 = vector.load %arg5[%c12_157, %c0_158] : memref<18x128xf32, #tpu.memory_space<vmem>>, vector<1x32xf32>
    %c13_159 = arith.constant 13 : index
    %c0_160 = arith.constant 0 : index
    %307 = vector.load %arg5[%c13_159, %c0_160] : memref<18x128xf32, #tpu.memory_space<vmem>>, vector<1x32xf32>
    %c14_161 = arith.constant 14 : index
    %c0_162 = arith.constant 0 : index
    %308 = vector.load %arg5[%c14_161, %c0_162] : memref<18x128xf32, #tpu.memory_space<vmem>>, vector<1x128xf32>
    %c15_163 = arith.constant 15 : index
    %c0_164 = arith.constant 0 : index
    %309 = vector.load %arg5[%c15_163, %c0_164] : memref<18x128xf32, #tpu.memory_space<vmem>>, vector<1x32xf32>
    %cst_165 = arith.constant dense<0.000000e+00> : vector<16xf32>
    %310 = vector.multi_reduction <add>, %297, %cst_165 [1] : vector<16x32xf32> to vector<16xf32>
    %311 = vector.shape_cast %310 : vector<16xf32> to vector<16x1xf32>
    %cst_166 = arith.constant 3.200000e+01 : f32
    %312 = vector.broadcast %cst_166 : f32 to vector<16x1xf32>
    %313 = arith.divf %311, %312 : vector<16x1xf32>
    %314 = vector.broadcast %313 : vector<16x1xf32> to vector<16x32xf32>
    %315 = arith.subf %297, %314 : vector<16x32xf32>
    %316 = arith.mulf %315, %315 : vector<16x32xf32>
    %cst_167 = arith.constant dense<0.000000e+00> : vector<16xf32>
    %317 = vector.multi_reduction <add>, %316, %cst_167 [1] : vector<16x32xf32> to vector<16xf32>
    %318 = vector.shape_cast %317 : vector<16xf32> to vector<16x1xf32>
    %cst_168 = arith.constant 3.200000e+01 : f32
    %319 = vector.broadcast %cst_168 : f32 to vector<16x1xf32>
    %320 = arith.divf %318, %319 : vector<16x1xf32>
    %321 = vector.broadcast %313 : vector<16x1xf32> to vector<16x32xf32>
    %322 = arith.subf %297, %321 : vector<16x32xf32>
    %cst_169 = arith.constant 9.99999974E-6 : f32
    %323 = vector.broadcast %cst_169 : f32 to vector<16x1xf32>
    %324 = arith.addf %320, %323 : vector<16x1xf32>
    %325 = math.rsqrt %324 : vector<16x1xf32>
    %326 = vector.broadcast %325 : vector<16x1xf32> to vector<16x32xf32>
    %327 = arith.mulf %322, %326 : vector<16x32xf32>
    %328 = vector.broadcast %302 : vector<1x32xf32> to vector<16x32xf32>
    %329 = arith.mulf %327, %328 : vector<16x32xf32>
    %330 = vector.broadcast %303 : vector<1x32xf32> to vector<16x32xf32>
    %331 = arith.addf %329, %330 : vector<16x32xf32>
    %332 = arith.truncf %331 : vector<16x32xf32> to vector<16x32xbf16>
    %cst_170 = arith.constant dense<0.000000e+00> : vector<16x128xf32>
    %333 = tpu.matmul %332, %298, %cst_170 {dimension_numbers = #tpu.dot_dimension_numbers<[1], [0], [0], [1], [0, 0, 1, 1], [], []>} : vector<16x32xbf16>, vector<32x128xbf16>, vector<16x128xf32> -> vector<16x128xf32>
    %334 = vector.broadcast %304 : vector<1x128xf32> to vector<16x128xf32>
    %335 = arith.addf %333, %334 : vector<16x128xf32>
    %336 = arith.truncf %335 : vector<16x128xf32> to vector<16x128xbf16>
    %cst_171 = arith.constant 0.000000e+00 : f32
    %337 = vector.broadcast %cst_171 : f32 to vector<16x128xf32>
    %338 = vector.extract_strided_slice %336 {offsets = [0, 0], sizes = [8, 16], strides = [1, 1]} : vector<16x128xbf16> to vector<8x16xbf16>
    %339 = vector.extract_strided_slice %336 {offsets = [0, 32], sizes = [8, 16], strides = [1, 1]} : vector<16x128xbf16> to vector<8x16xbf16>
    %340 = vector.extract_strided_slice %336 {offsets = [0, 64], sizes = [8, 16], strides = [1, 1]} : vector<16x128xbf16> to vector<8x16xbf16>
    %cst_172 = arith.constant dense<0.000000e+00> : vector<8x8xf32>
    %341 = tpu.matmul %338, %339, %cst_172 {dimension_numbers = #tpu.dot_dimension_numbers<[1], [1], [0], [0], [0, 0, 1, 0], [], []>} : vector<8x16xbf16>, vector<8x16xbf16>, vector<8x8xf32> -> vector<8x8xf32>
    %cst_173 = arith.constant 2.500000e-01 : f32
    %342 = vector.broadcast %cst_173 : f32 to vector<8x8xf32>
    %343 = arith.mulf %341, %342 : vector<8x8xf32>
    %344 = arith.addf %343, %122 : vector<8x8xf32>
    %cst_174 = arith.constant dense<0xFF800000> : vector<8xf32>
    %345 = vector.multi_reduction <maximumf>, %344, %cst_174 [1] : vector<8x8xf32> to vector<8xf32>
    %346 = vector.shape_cast %345 : vector<8xf32> to vector<8x1xf32>
    %347 = vector.broadcast %346 : vector<8x1xf32> to vector<8x8xf32>
    %348 = arith.subf %344, %347 : vector<8x8xf32>
    %349 = math.exp %348 : vector<8x8xf32>
    %cst_175 = arith.constant dense<0.000000e+00> : vector<8xf32>
    %350 = vector.multi_reduction <add>, %349, %cst_175 [1] : vector<8x8xf32> to vector<8xf32>
    %351 = vector.shape_cast %350 : vector<8xf32> to vector<8x1xf32>
    %352 = tpu.reciprocal %351 {approx = true} : vector<8x1xf32> -> vector<8x1xf32>
    %353 = vector.broadcast %352 : vector<8x1xf32> to vector<8x8xf32>
    %354 = arith.mulf %349, %353 : vector<8x8xf32>
    %355 = arith.truncf %354 : vector<8x8xf32> to vector<8x8xbf16>
    %cst_176 = arith.constant dense<0.000000e+00> : vector<8x16xf32>
    %356 = tpu.matmul %355, %340, %cst_176 {dimension_numbers = #tpu.dot_dimension_numbers<[1], [0], [0], [1], [0, 0, 1, 1], [], []>} : vector<8x8xbf16>, vector<8x16xbf16>, vector<8x16xf32> -> vector<8x16xf32>
    %357 = vector.extract_strided_slice %336 {offsets = [8, 0], sizes = [8, 16], strides = [1, 1]} : vector<16x128xbf16> to vector<8x16xbf16>
    %358 = vector.extract_strided_slice %336 {offsets = [8, 32], sizes = [8, 16], strides = [1, 1]} : vector<16x128xbf16> to vector<8x16xbf16>
    %359 = vector.extract_strided_slice %336 {offsets = [8, 64], sizes = [8, 16], strides = [1, 1]} : vector<16x128xbf16> to vector<8x16xbf16>
    %cst_177 = arith.constant dense<0.000000e+00> : vector<8x8xf32>
    %360 = tpu.matmul %357, %358, %cst_177 {dimension_numbers = #tpu.dot_dimension_numbers<[1], [1], [0], [0], [0, 0, 1, 0], [], []>} : vector<8x16xbf16>, vector<8x16xbf16>, vector<8x8xf32> -> vector<8x8xf32>
    %cst_178 = arith.constant 2.500000e-01 : f32
    %361 = vector.broadcast %cst_178 : f32 to vector<8x8xf32>
    %362 = arith.mulf %360, %361 : vector<8x8xf32>
    %363 = arith.addf %362, %122 : vector<8x8xf32>
    %cst_179 = arith.constant dense<0xFF800000> : vector<8xf32>
    %364 = vector.multi_reduction <maximumf>, %363, %cst_179 [1] : vector<8x8xf32> to vector<8xf32>
    %365 = vector.shape_cast %364 : vector<8xf32> to vector<8x1xf32>
    %366 = vector.broadcast %365 : vector<8x1xf32> to vector<8x8xf32>
    %367 = arith.subf %363, %366 : vector<8x8xf32>
    %368 = math.exp %367 : vector<8x8xf32>
    %cst_180 = arith.constant dense<0.000000e+00> : vector<8xf32>
    %369 = vector.multi_reduction <add>, %368, %cst_180 [1] : vector<8x8xf32> to vector<8xf32>
    %370 = vector.shape_cast %369 : vector<8xf32> to vector<8x1xf32>
    %371 = tpu.reciprocal %370 {approx = true} : vector<8x1xf32> -> vector<8x1xf32>
    %372 = vector.broadcast %371 : vector<8x1xf32> to vector<8x8xf32>
    %373 = arith.mulf %368, %372 : vector<8x8xf32>
    %374 = arith.truncf %373 : vector<8x8xf32> to vector<8x8xbf16>
    %cst_181 = arith.constant dense<0.000000e+00> : vector<8x16xf32>
    %375 = tpu.matmul %374, %359, %cst_181 {dimension_numbers = #tpu.dot_dimension_numbers<[1], [0], [0], [1], [0, 0, 1, 1], [], []>} : vector<8x8xbf16>, vector<8x16xbf16>, vector<8x16xf32> -> vector<8x16xf32>
    %376 = tpu.concatenate %356, %375 in 0 : vector<8x16xf32>, vector<8x16xf32> -> vector<16x16xf32>
    %377 = arith.truncf %376 : vector<16x16xf32> to vector<16x16xbf16>
    %378 = vector.extract_strided_slice %299 {offsets = [0, 0], sizes = [16, 128], strides = [1, 1]} : vector<32x128xbf16> to vector<16x128xbf16>
    %cst_182 = arith.constant dense<0.000000e+00> : vector<16x128xf32>
    %379 = tpu.matmul %377, %378, %cst_182 {dimension_numbers = #tpu.dot_dimension_numbers<[1], [0], [0], [1], [0, 0, 1, 1], [], []>} : vector<16x16xbf16>, vector<16x128xbf16>, vector<16x128xf32> -> vector<16x128xf32>
    %380 = arith.addf %337, %379 : vector<16x128xf32>
    %381 = vector.extract_strided_slice %336 {offsets = [0, 16], sizes = [8, 16], strides = [1, 1]} : vector<16x128xbf16> to vector<8x16xbf16>
    %382 = vector.extract_strided_slice %336 {offsets = [0, 48], sizes = [8, 16], strides = [1, 1]} : vector<16x128xbf16> to vector<8x16xbf16>
    %383 = vector.extract_strided_slice %336 {offsets = [0, 80], sizes = [8, 16], strides = [1, 1]} : vector<16x128xbf16> to vector<8x16xbf16>
    %cst_183 = arith.constant dense<0.000000e+00> : vector<8x8xf32>
    %384 = tpu.matmul %381, %382, %cst_183 {dimension_numbers = #tpu.dot_dimension_numbers<[1], [1], [0], [0], [0, 0, 1, 0], [], []>} : vector<8x16xbf16>, vector<8x16xbf16>, vector<8x8xf32> -> vector<8x8xf32>
    %cst_184 = arith.constant 2.500000e-01 : f32
    %385 = vector.broadcast %cst_184 : f32 to vector<8x8xf32>
    %386 = arith.mulf %384, %385 : vector<8x8xf32>
    %387 = arith.addf %386, %122 : vector<8x8xf32>
    %cst_185 = arith.constant dense<0xFF800000> : vector<8xf32>
    %388 = vector.multi_reduction <maximumf>, %387, %cst_185 [1] : vector<8x8xf32> to vector<8xf32>
    %389 = vector.shape_cast %388 : vector<8xf32> to vector<8x1xf32>
    %390 = vector.broadcast %389 : vector<8x1xf32> to vector<8x8xf32>
    %391 = arith.subf %387, %390 : vector<8x8xf32>
    %392 = math.exp %391 : vector<8x8xf32>
    %cst_186 = arith.constant dense<0.000000e+00> : vector<8xf32>
    %393 = vector.multi_reduction <add>, %392, %cst_186 [1] : vector<8x8xf32> to vector<8xf32>
    %394 = vector.shape_cast %393 : vector<8xf32> to vector<8x1xf32>
    %395 = tpu.reciprocal %394 {approx = true} : vector<8x1xf32> -> vector<8x1xf32>
    %396 = vector.broadcast %395 : vector<8x1xf32> to vector<8x8xf32>
    %397 = arith.mulf %392, %396 : vector<8x8xf32>
    %398 = arith.truncf %397 : vector<8x8xf32> to vector<8x8xbf16>
    %cst_187 = arith.constant dense<0.000000e+00> : vector<8x16xf32>
    %399 = tpu.matmul %398, %383, %cst_187 {dimension_numbers = #tpu.dot_dimension_numbers<[1], [0], [0], [1], [0, 0, 1, 1], [], []>} : vector<8x8xbf16>, vector<8x16xbf16>, vector<8x16xf32> -> vector<8x16xf32>
    %400 = vector.extract_strided_slice %336 {offsets = [8, 16], sizes = [8, 16], strides = [1, 1]} : vector<16x128xbf16> to vector<8x16xbf16>
    %401 = vector.extract_strided_slice %336 {offsets = [8, 48], sizes = [8, 16], strides = [1, 1]} : vector<16x128xbf16> to vector<8x16xbf16>
    %402 = vector.extract_strided_slice %336 {offsets = [8, 80], sizes = [8, 16], strides = [1, 1]} : vector<16x128xbf16> to vector<8x16xbf16>
    %cst_188 = arith.constant dense<0.000000e+00> : vector<8x8xf32>
    %403 = tpu.matmul %400, %401, %cst_188 {dimension_numbers = #tpu.dot_dimension_numbers<[1], [1], [0], [0], [0, 0, 1, 0], [], []>} : vector<8x16xbf16>, vector<8x16xbf16>, vector<8x8xf32> -> vector<8x8xf32>
    %cst_189 = arith.constant 2.500000e-01 : f32
    %404 = vector.broadcast %cst_189 : f32 to vector<8x8xf32>
    %405 = arith.mulf %403, %404 : vector<8x8xf32>
    %406 = arith.addf %405, %122 : vector<8x8xf32>
    %cst_190 = arith.constant dense<0xFF800000> : vector<8xf32>
    %407 = vector.multi_reduction <maximumf>, %406, %cst_190 [1] : vector<8x8xf32> to vector<8xf32>
    %408 = vector.shape_cast %407 : vector<8xf32> to vector<8x1xf32>
    %409 = vector.broadcast %408 : vector<8x1xf32> to vector<8x8xf32>
    %410 = arith.subf %406, %409 : vector<8x8xf32>
    %411 = math.exp %410 : vector<8x8xf32>
    %cst_191 = arith.constant dense<0.000000e+00> : vector<8xf32>
    %412 = vector.multi_reduction <add>, %411, %cst_191 [1] : vector<8x8xf32> to vector<8xf32>
    %413 = vector.shape_cast %412 : vector<8xf32> to vector<8x1xf32>
    %414 = tpu.reciprocal %413 {approx = true} : vector<8x1xf32> -> vector<8x1xf32>
    %415 = vector.broadcast %414 : vector<8x1xf32> to vector<8x8xf32>
    %416 = arith.mulf %411, %415 : vector<8x8xf32>
    %417 = arith.truncf %416 : vector<8x8xf32> to vector<8x8xbf16>
    %cst_192 = arith.constant dense<0.000000e+00> : vector<8x16xf32>
    %418 = tpu.matmul %417, %402, %cst_192 {dimension_numbers = #tpu.dot_dimension_numbers<[1], [0], [0], [1], [0, 0, 1, 1], [], []>} : vector<8x8xbf16>, vector<8x16xbf16>, vector<8x16xf32> -> vector<8x16xf32>
    %419 = tpu.concatenate %399, %418 in 0 : vector<8x16xf32>, vector<8x16xf32> -> vector<16x16xf32>
    %420 = arith.truncf %419 : vector<16x16xf32> to vector<16x16xbf16>
    %421 = vector.extract_strided_slice %299 {offsets = [16, 0], sizes = [16, 128], strides = [1, 1]} : vector<32x128xbf16> to vector<16x128xbf16>
    %cst_193 = arith.constant dense<0.000000e+00> : vector<16x128xf32>
    %422 = tpu.matmul %420, %421, %cst_193 {dimension_numbers = #tpu.dot_dimension_numbers<[1], [0], [0], [1], [0, 0, 1, 1], [], []>} : vector<16x16xbf16>, vector<16x128xbf16>, vector<16x128xf32> -> vector<16x128xf32>
    %423 = arith.addf %380, %422 : vector<16x128xf32>
    %424 = vector.extract_strided_slice %423 {offsets = [0, 0], sizes = [16, 32], strides = [1, 1]} : vector<16x128xf32> to vector<16x32xf32>
    %425 = arith.addf %297, %424 : vector<16x32xf32>
    %426 = vector.broadcast %305 : vector<1x32xf32> to vector<16x32xf32>
    %427 = arith.addf %425, %426 : vector<16x32xf32>
    %cst_194 = arith.constant dense<0.000000e+00> : vector<16xf32>
    %428 = vector.multi_reduction <add>, %427, %cst_194 [1] : vector<16x32xf32> to vector<16xf32>
    %429 = vector.shape_cast %428 : vector<16xf32> to vector<16x1xf32>
    %cst_195 = arith.constant 3.200000e+01 : f32
    %430 = vector.broadcast %cst_195 : f32 to vector<16x1xf32>
    %431 = arith.divf %429, %430 : vector<16x1xf32>
    %432 = vector.broadcast %431 : vector<16x1xf32> to vector<16x32xf32>
    %433 = arith.subf %427, %432 : vector<16x32xf32>
    %434 = arith.mulf %433, %433 : vector<16x32xf32>
    %cst_196 = arith.constant dense<0.000000e+00> : vector<16xf32>
    %435 = vector.multi_reduction <add>, %434, %cst_196 [1] : vector<16x32xf32> to vector<16xf32>
    %436 = vector.shape_cast %435 : vector<16xf32> to vector<16x1xf32>
    %cst_197 = arith.constant 3.200000e+01 : f32
    %437 = vector.broadcast %cst_197 : f32 to vector<16x1xf32>
    %438 = arith.divf %436, %437 : vector<16x1xf32>
    %439 = vector.broadcast %431 : vector<16x1xf32> to vector<16x32xf32>
    %440 = arith.subf %427, %439 : vector<16x32xf32>
    %cst_198 = arith.constant 9.99999974E-6 : f32
    %441 = vector.broadcast %cst_198 : f32 to vector<16x1xf32>
    %442 = arith.addf %438, %441 : vector<16x1xf32>
    %443 = math.rsqrt %442 : vector<16x1xf32>
    %444 = vector.broadcast %443 : vector<16x1xf32> to vector<16x32xf32>
    %445 = arith.mulf %440, %444 : vector<16x32xf32>
    %446 = vector.broadcast %306 : vector<1x32xf32> to vector<16x32xf32>
    %447 = arith.mulf %445, %446 : vector<16x32xf32>
    %448 = vector.broadcast %307 : vector<1x32xf32> to vector<16x32xf32>
    %449 = arith.addf %447, %448 : vector<16x32xf32>
    %450 = arith.truncf %449 : vector<16x32xf32> to vector<16x32xbf16>
    %cst_199 = arith.constant dense<0.000000e+00> : vector<16x128xf32>
    %451 = tpu.matmul %450, %300, %cst_199 {dimension_numbers = #tpu.dot_dimension_numbers<[1], [0], [0], [1], [0, 0, 1, 1], [], []>} : vector<16x32xbf16>, vector<32x128xbf16>, vector<16x128xf32> -> vector<16x128xf32>
    %452 = vector.broadcast %308 : vector<1x128xf32> to vector<16x128xf32>
    %453 = arith.addf %451, %452 : vector<16x128xf32>
    %cst_200 = arith.constant 5.000000e-01 : f32
    %454 = vector.broadcast %cst_200 : f32 to vector<16x128xf32>
    %455 = arith.mulf %454, %453 : vector<16x128xf32>
    %cst_201 = arith.constant 4.471500e-02 : f32
    %456 = vector.broadcast %cst_201 : f32 to vector<16x128xf32>
    %457 = arith.mulf %456, %453 : vector<16x128xf32>
    %458 = arith.mulf %457, %453 : vector<16x128xf32>
    %459 = arith.mulf %458, %453 : vector<16x128xf32>
    %460 = arith.addf %453, %459 : vector<16x128xf32>
    %cst_202 = arith.constant 0.797884583 : f32
    %461 = vector.broadcast %cst_202 : f32 to vector<16x128xf32>
    %462 = arith.mulf %461, %460 : vector<16x128xf32>
    %463 = math.tanh %462 : vector<16x128xf32>
    %cst_203 = arith.constant 1.000000e+00 : f32
    %464 = vector.broadcast %cst_203 : f32 to vector<16x128xf32>
    %465 = arith.addf %464, %463 : vector<16x128xf32>
    %466 = arith.mulf %455, %465 : vector<16x128xf32>
    %467 = arith.truncf %466 : vector<16x128xf32> to vector<16x128xbf16>
    %cst_204 = arith.constant dense<0.000000e+00> : vector<16x128xf32>
    %468 = tpu.matmul %467, %301, %cst_204 {dimension_numbers = #tpu.dot_dimension_numbers<[1], [0], [0], [1], [0, 0, 1, 1], [], []>} : vector<16x128xbf16>, vector<128x128xbf16>, vector<16x128xf32> -> vector<16x128xf32>
    %469 = vector.extract_strided_slice %468 {offsets = [0, 0], sizes = [16, 32], strides = [1, 1]} : vector<16x128xf32> to vector<16x32xf32>
    %470 = arith.addf %427, %469 : vector<16x32xf32>
    %471 = vector.broadcast %309 : vector<1x32xf32> to vector<16x32xf32>
    %472 = arith.addf %470, %471 : vector<16x32xf32>
    %c448 = arith.constant 448 : index
    %c0_205 = arith.constant 0 : index
    %473 = vector.load %arg4[%c448, %c0_205] : memref<480x128xbf16, #tpu.memory_space<vmem>>, vector<32x128xbf16>
    %c16 = arith.constant 16 : index
    %c0_206 = arith.constant 0 : index
    %474 = vector.load %arg5[%c16, %c0_206] : memref<18x128xf32, #tpu.memory_space<vmem>>, vector<1x32xf32>
    %c17 = arith.constant 17 : index
    %c0_207 = arith.constant 0 : index
    %475 = vector.load %arg5[%c17, %c0_207] : memref<18x128xf32, #tpu.memory_space<vmem>>, vector<1x32xf32>
    %cst_208 = arith.constant dense<0.000000e+00> : vector<16xf32>
    %476 = vector.multi_reduction <add>, %472, %cst_208 [1] : vector<16x32xf32> to vector<16xf32>
    %477 = vector.shape_cast %476 : vector<16xf32> to vector<16x1xf32>
    %cst_209 = arith.constant 3.200000e+01 : f32
    %478 = vector.broadcast %cst_209 : f32 to vector<16x1xf32>
    %479 = arith.divf %477, %478 : vector<16x1xf32>
    %480 = vector.broadcast %479 : vector<16x1xf32> to vector<16x32xf32>
    %481 = arith.subf %472, %480 : vector<16x32xf32>
    %482 = arith.mulf %481, %481 : vector<16x32xf32>
    %cst_210 = arith.constant dense<0.000000e+00> : vector<16xf32>
    %483 = vector.multi_reduction <add>, %482, %cst_210 [1] : vector<16x32xf32> to vector<16xf32>
    %484 = vector.shape_cast %483 : vector<16xf32> to vector<16x1xf32>
    %cst_211 = arith.constant 3.200000e+01 : f32
    %485 = vector.broadcast %cst_211 : f32 to vector<16x1xf32>
    %486 = arith.divf %484, %485 : vector<16x1xf32>
    %487 = vector.broadcast %479 : vector<16x1xf32> to vector<16x32xf32>
    %488 = arith.subf %472, %487 : vector<16x32xf32>
    %cst_212 = arith.constant 9.99999974E-6 : f32
    %489 = vector.broadcast %cst_212 : f32 to vector<16x1xf32>
    %490 = arith.addf %486, %489 : vector<16x1xf32>
    %491 = math.rsqrt %490 : vector<16x1xf32>
    %492 = vector.broadcast %491 : vector<16x1xf32> to vector<16x32xf32>
    %493 = arith.mulf %488, %492 : vector<16x32xf32>
    %494 = vector.broadcast %474 : vector<1x32xf32> to vector<16x32xf32>
    %495 = arith.mulf %493, %494 : vector<16x32xf32>
    %496 = vector.broadcast %475 : vector<1x32xf32> to vector<16x32xf32>
    %497 = arith.addf %495, %496 : vector<16x32xf32>
    %498 = arith.truncf %497 : vector<16x32xf32> to vector<16x32xbf16>
    %cst_213 = arith.constant dense<0.000000e+00> : vector<16x128xf32>
    %499 = tpu.matmul %498, %473, %cst_213 {dimension_numbers = #tpu.dot_dimension_numbers<[1], [0], [0], [1], [0, 0, 1, 1], [], []>} : vector<16x32xbf16>, vector<32x128xbf16>, vector<16x128xf32> -> vector<16x128xf32>
    %c0_214 = arith.constant 0 : index
    %c0_215 = arith.constant 0 : index
    %500 = vector.load %arg6[%c0_214, %c0_215] : memref<16x128xf32, #tpu.memory_space<vmem>>, vector<16x128xf32>
    tpu.vector_store %arg6[%c0_214, %c0_215], %499 {strides = array<i32>} : memref<16x128xf32, #tpu.memory_space<vmem>>, vector<16x128xf32>,
    return
  }
  func.func @transform_0(%arg0: i32, %arg1: memref<2x8xi32, #tpu.memory_space<smem>>) -> (i32, i32) {
    %c0_i32 = arith.constant 0 : i32
    %c0_i32_0 = arith.constant 0 : i32
    %c0_i32_1 = arith.constant 0 : i32
    return %c0_i32, %c0_i32_0 : i32, i32
  }
  func.func @transform_1(%arg0: i32, %arg1: memref<2x8xi32, #tpu.memory_space<smem>>) -> (i32, i32) {
    %c0_i32 = arith.constant 0 : i32
    %c0_i32_0 = arith.constant 0 : i32
    %c0_i32_1 = arith.constant 0 : i32
    return %c0_i32, %c0_i32_0 : i32, i32
  }
  func.func @transform_2(%arg0: i32, %arg1: memref<2x8xi32, #tpu.memory_space<smem>>) -> (i32, i32) {
    %c0_i32 = arith.constant 0 : i32
    %c0_i32_0 = arith.constant 0 : i32
    %c0_i32_1 = arith.constant 0 : i32
    return %c0_i32, %c0_i32_0 : i32, i32
  }
  func.func @transform_3(%arg0: i32, %arg1: memref<2x8xi32, #tpu.memory_space<smem>>) -> (i32, i32) {
    %c0_i32 = arith.constant 0 : i32
    %c0_i32_0 = arith.constant 0 : i32
    %c0_i32_1 = arith.constant 0 : i32
    return %c0_i32, %c0_i32_0 : i32, i32
  }
  func.func @transform_4(%arg0: i32, %arg1: memref<2x8xi32, #tpu.memory_space<smem>>) -> (i32, i32) {
    %c0_i32 = arith.constant 0 : i32
    %c0_i32_0 = arith.constant 0 : i32
    return %arg0, %c0_i32 : i32, i32
  }
}

</mosaic_0001>

<llo_original>
// kernel: _lambda_.1
$region0: #{_lambda_.1}
  #allocation0 [shape = 'u32[]', space=smem, size = 0x4, offset = 0x4, fixed_abs, tag = 'smem constant byte address 0x4 - core index']
  #allocation1 [shape = 'u32[72,128]{1,0:T(1,128)}', space=vmem, size = 0x9000, scoped, tag = 'internal scratch']
  #allocation2 [shape = 'f32[16,32]{1,0:T(8,128)}', space=vmem, size = 0x2000, scoped, tag = 'scratch operand']
  #allocation3 [shape = 's32[1]{0}', space=sflag, size = 0x4, scoped, tag = 'scoped memory for _lambda_.1']
  #allocation4 [shape = 'u8[1024]{0}', space=smem, size = 0x400, scoped, tag = 'prefetched SMEM operand 0']
  %s0 = inlined_call_operand.vmem [shape: s32[2,8], index: 0, kind: input, shape index: {}]
  %s1 = inlined_call_operand.vmem [shape: f32[128,32], index: 1, kind: input, shape index: {}]
  %s2 = inlined_call_operand.vmem [shape: f32[16,32], index: 2, kind: input, shape index: {}]
  %s3 = inlined_call_operand.hbm [shape: bf16[480,128], index: 3, kind: input, shape index: {}]
  %s4 = inlined_call_operand.vmem [shape: f32[18,128], index: 4, kind: input, shape index: {}]
  %s5 = inlined_call_operand.hbm [shape: f32[16,128], index: 5, kind: output, shape index: {}]
  %s6 = sld [smem:[#allocation0]]
  $region30: #{_lambda_.1} parent=0
    _
  %s8 = ssub.s32 1, %s6
  %s9 = scalar_select 0, %s8, %s6
  %s11 = sshll.u32 %s0, 4
  %s12 = int_to_ptr.vmem [resolvable:$true] %s11
  %14 = dma.vmem_to_smem %s12, 32, [#allocation4], [#allocation3]
  %16 = dma.done [#allocation3], 32
  %17 = sfence
  $region1: #{_lambda_.1} parent=0
    #allocation5 [shape = 'u8[122880]{0}', space=vmem, size = 0x1e000, scoped, tag = 'input window, operand 3, single buffered']
    #allocation6 [shape = 's32[1]{0}', space=sflag, size = 0x4, scoped, tag = 'scoped memory for _lambda_.1']
    #allocation7 [shape = 's32[1]{0}', space=sflag, size = 0x4, scoped, tag = 'scoped memory for _lambda_.1']
    #allocation8 [shape = 'u8[8192]{0}', space=vmem, size = 0x2000, scoped, tag = 'output window, operand 0, single buffered']
    %18 = vsyncpa [#allocation6], 0
    %19 = vsyncpa [#allocation7], 0
    // Predicated region
    $region2: #{_lambda_.1} parent=1 // pred_check
      _
    $region3: #{_lambda_.1} parent=1 // pred_check_branch
      %21 = sbr.rel (0) target = $region5
    $region4: #{_lambda_.1} parent=1 // pred_region
      _
    $region5: #{_lambda_.1} parent=1 // pred_fallthru
      _
    // Predicated region
    $region6: #{_lambda_.1} parent=1 // pred_check
      _
    $region7: #{_lambda_.1} parent=1 // pred_check_branch
      %23 = sbr.rel (0) target = $region9
    $region8: #{_lambda_.1} parent=1 // pred_region
      _
    $region9: #{_lambda_.1} parent=1 // pred_fallthru
      _
    // Predicated region
    $region10: #{_lambda_.1} parent=1 // pred_check
      _
    $region11: #{_lambda_.1} parent=1 // pred_check_branch
      %25 = sbr.rel (0) target = $region13
    $region12: #{_lambda_.1} parent=1 // pred_region
      %27 = vsyncadd [#allocation6], 0
      %s28 = sshll.u32 %s3, 4
      %s29 = int_to_ptr.hbm [resolvable:$true] %s28
      %s30 = sshll.u32 [#allocation5], 4
      %s31 = int_to_ptr.vmem [resolvable:$true] %s30
      %36 = dma.hbm_to_vmem [thread:$0]  %s29, 3840, %s31, [#allocation6], 64, 64, 4
    $region13: #{_lambda_.1} parent=1 // pred_fallthru
      _
    // Predicated region
    $region14: #{_lambda_.1} parent=1 // pred_check
      _
    $region15: #{_lambda_.1} parent=1 // pred_check_branch
      %38 = sbr.rel (0) target = $region17
    $region16: #{_lambda_.1} parent=1 // pred_region
      _
    $region17: #{_lambda_.1} parent=1 // pred_fallthru
      _
    // Predicated region
    $region18: #{_lambda_.1} parent=1 // pred_check
      _
    $region19: #{_lambda_.1} parent=1 // pred_check_branch
      %40 = sbr.rel (0) target = $region21
    $region20: #{_lambda_.1} parent=1 // pred_region
      %42 = dma.done [#allocation6], 3840
    $region21: #{_lambda_.1} parent=1 // pred_fallthru
      _
    %s44 = smul.u32 0, 2
    %s45 = smul.u32 %s44, 128
    %s46 = sld [smem:[#allocation4 + %s45]]
    %s47 = scalar_lea.vmem %s1, %s46
    %v48 = vld [vmem:[%s47] sm:$0x1]
    %v49 = vld [vmem:[%s2] sm:$0x1]
    %v50 = vadd.f32 %v48, %v49
    %vm51 = vcmask 253952
    %52 = vst.msk [vmem:[#allocation2] sm:$0x1] %vm51, %v50
    %s53 = sadd.s32 %s45, 1
    %s54 = sld [smem:[#allocation4 + %s53]]
    %s55 = scalar_lea.vmem %s1, %s54
    %v56 = vld [vmem:[%s55] sm:$0x1]
    %v57 = vld [vmem:[%s2 + $0x1] sm:$0x1]
    %v58 = vadd.f32 %v56, %v57
    %59 = vst.msk [vmem:[#allocation2 + $0x1] sm:$0x1] %vm51, %v58
    %s60 = sadd.s32 %s45, 2
    %s61 = sld [smem:[#allocation4 + %s60]]
    %s62 = scalar_lea.vmem %s1, %s61
    %v63 = vld [vmem:[%s62] sm:$0x1]
    %v64 = vld [vmem:[%s2 + $0x2] sm:$0x1]
    %v65 = vadd.f32 %v63, %v64
    %66 = vst.msk [vmem:[#allocation2 + $0x2] sm:$0x1] %vm51, %v65
    %s67 = sadd.s32 %s45, 3
    %s68 = sld [smem:[#allocation4 + %s67]]
    %s69 = scalar_lea.vmem %s1, %s68
    %v70 = vld [vmem:[%s69] sm:$0x1]
    %v71 = vld [vmem:[%s2 + $0x3] sm:$0x1]
    %v72 = vadd.f32 %v70, %v71
    %73 = vst.msk [vmem:[#allocation2 + $0x3] sm:$0x1] %vm51, %v72
    %s74 = sadd.s32 %s45, 4
    %s75 = sld [smem:[#allocation4 + %s74]]
    %s76 = scalar_lea.vmem %s1, %s75
    %v77 = vld [vmem:[%s76] sm:$0x1]
    %v78 = vld [vmem:[%s2 + $0x4] sm:$0x1]
    %v79 = vadd.f32 %v77, %v78
    %80 = vst.msk [vmem:[#allocation2 + $0x4] sm:$0x1] %vm51, %v79
    %s81 = sadd.s32 %s45, 5
    %s82 = sld [smem:[#allocation4 + %s81]]
    %s83 = scalar_lea.vmem %s1, %s82
    %v84 = vld [vmem:[%s83] sm:$0x1]
    %v85 = vld [vmem:[%s2 + $0x5] sm:$0x1]
    %v86 = vadd.f32 %v84, %v85
    %87 = vst.msk [vmem:[#allocation2 + $0x5] sm:$0x1] %vm51, %v86
    %s88 = sadd.s32 %s45, 6
    %s89 = sld [smem:[#allocation4 + %s88]]
    %s90 = scalar_lea.vmem %s1, %s89
    %v91 = vld [vmem:[%s90] sm:$0x1]
    %v92 = vld [vmem:[%s2 + $0x6] sm:$0x1]
    %v93 = vadd.f32 %v91, %v92
    %94 = vst.msk [vmem:[#allocation2 + $0x6] sm:$0x1] %vm51, %v93
    %s95 = sadd.s32 %s45, 7
    %s96 = sld [smem:[#allocation4 + %s95]]
    %s97 = scalar_lea.vmem %s1, %s96
    %v98 = vld [vmem:[%s97] sm:$0x1]
    %v99 = vld [vmem:[%s2 + $0x7] sm:$0x1]
    %v100 = vadd.f32 %v98, %v99
    %101 = vst.msk [vmem:[#allocation2 + $0x7] sm:$0x1] %vm51, %v100
    %s102 = sadd.s32 %s44, 1
    %s103 = smul.u32 %s102, 128
    %s104 = sld [smem:[#allocation4 + %s103]]
    %s105 = scalar_lea.vmem %s1, %s104
    %v106 = vld [vmem:[%s105] sm:$0x1]
    %v107 = vld [vmem:[%s2] sm:$0x1]
    %v108 = vadd.f32 %v106, %v107
    %109 = vst.msk [vmem:[#allocation2 + $0x8] sm:$0x1] %vm51, %v108
    %s110 = sadd.s32 %s103, 1
    %s111 = sld [smem:[#allocation4 + %s110]]
    %s112 = scalar_lea.vmem %s1, %s111
    %v113 = vld [vmem:[%s112] sm:$0x1]
    %v114 = vld [vmem:[%s2 + $0x1] sm:$0x1]
    %v115 = vadd.f32 %v113, %v114
    %116 = vst.msk [vmem:[#allocation2 + $0x9] sm:$0x1] %vm51, %v115
    %s117 = sadd.s32 %s103, 2
    %s118 = sld [smem:[#allocation4 + %s117]]
    %s119 = scalar_lea.vmem %s1, %s118
    %v120 = vld [vmem:[%s119] sm:$0x1]
    %v121 = vld [vmem:[%s2 + $0x2] sm:$0x1]
    %v122 = vadd.f32 %v120, %v121
    %123 = vst.msk [vmem:[#allocation2 + $0xa] sm:$0x1] %vm51, %v122
    %s124 = sadd.s32 %s103, 3
    %s125 = sld [smem:[#allocation4 + %s124]]
    %s126 = scalar_lea.vmem %s1, %s125
    %v127 = vld [vmem:[%s126] sm:$0x1]
    %v128 = vld [vmem:[%s2 + $0x3] sm:$0x1]
    %v129 = vadd.f32 %v127, %v128
    %130 = vst.msk [vmem:[#allocation2 + $0xb] sm:$0x1] %vm51, %v129
    %s131 = sadd.s32 %s103, 4
    %s132 = sld [smem:[#allocation4 + %s131]]
    %s133 = scalar_lea.vmem %s1, %s132
    %v134 = vld [vmem:[%s133] sm:$0x1]
    %v135 = vld [vmem:[%s2 + $0x4] sm:$0x1]
    %v136 = vadd.f32 %v134, %v135
    %137 = vst.msk [vmem:[#allocation2 + $0xc] sm:$0x1] %vm51, %v136
    %s138 = sadd.s32 %s103, 5
    %s139 = sld [smem:[#allocation4 + %s138]]
    %s140 = scalar_lea.vmem %s1, %s139
    %v141 = vld [vmem:[%s140] sm:$0x1]
    %v142 = vld [vmem:[%s2 + $0x5] sm:$0x1]
    %v143 = vadd.f32 %v141, %v142
    %144 = vst.msk [vmem:[#allocation2 + $0xd] sm:$0x1] %vm51, %v143
    %s145 = sadd.s32 %s103, 6
    %s146 = sld [smem:[#allocation4 + %s145]]
    %s147 = scalar_lea.vmem %s1, %s146
    %v148 = vld [vmem:[%s147] sm:$0x1]
    %v149 = vld [vmem:[%s2 + $0x6] sm:$0x1]
    %v150 = vadd.f32 %v148, %v149
    %151 = vst.msk [vmem:[#allocation2 + $0xe] sm:$0x1] %vm51, %v150
    %s152 = sadd.s32 %s103, 7
    %s153 = sld [smem:[#allocation4 + %s152]]
    %s154 = scalar_lea.vmem %s1, %s153
    %v155 = vld [vmem:[%s154] sm:$0x1]
    %v156 = vld [vmem:[%s2 + $0x7] sm:$0x1]
    %v157 = vadd.f32 %v155, %v156
    %158 = vst.msk [vmem:[#allocation2 + $0xf] sm:$0x1] %vm51, %v157
    %v159 = vld [vmem:[#allocation2] sm:$0xff]
    %v160 = vld [vmem:[#allocation2 + $0x8] sm:$0xff]
    %v161 = vlaneseq
    %v162 = vshrl.u32 %v161, 7
    %v163 = vlaneseq
    %v164 = vand.u32 %v163, 127
    %vm165 = vcmp.ge.s32.totalorder %v162, %v164
    %v166 = vsel %vm165, 0.0, -1e+30
    %v167 = vld [vmem:[#allocation5] sm:$0xf]
    %v168 = vld [vmem:[#allocation5 + $0x4] sm:$0xf]
    %v169 = vld [vmem:[#allocation5 + $0x8] sm:$0xf]
    %v170 = vld [vmem:[#allocation5 + $0xc] sm:$0xf]
    %v171 = vld [vmem:[#allocation5 + $0x10] sm:$0xf]
    %v172 = vld [vmem:[#allocation5 + $0x14] sm:$0xf]
    %v173 = vld [vmem:[#allocation5 + $0x18] sm:$0xf]
    %v174 = vld [vmem:[#allocation5 + $0x1c] sm:$0xf]
    %v175 = vld [vmem:[#allocation5 + $0x20] sm:$0xf]
    %v176 = vld [vmem:[#allocation5 + $0x24] sm:$0xf]
    %v177 = vld [vmem:[#allocation5 + $0x28] sm:$0xf]
    %v178 = vld [vmem:[#allocation5 + $0x2c] sm:$0xf]
    %v179 = vld [vmem:[#allocation5 + $0x30] sm:$0xf]
    %v180 = vld [vmem:[#allocation5 + $0x34] sm:$0xf]
    %v181 = vld [vmem:[#allocation5 + $0x38] sm:$0xf]
    %v182 = vld [vmem:[#allocation5 + $0x3c] sm:$0xf]
    %v183 = vld [vmem:[#allocation5 + $0x40] sm:$0xf]
    %v184 = vld [vmem:[#allocation5 + $0x44] sm:$0xf]
    %v185 = vld [vmem:[#allocation5 + $0x48] sm:$0xf]
    %v186 = vld [vmem:[#allocation5 + $0x4c] sm:$0xf]
    %v187 = vld [vmem:[#allocation5 + $0x50] sm:$0xf]
    %v188 = vld [vmem:[#allocation5 + $0x54] sm:$0xf]
    %v189 = vld [vmem:[#allocation5 + $0x58] sm:$0xf]
    %v190 = vld [vmem:[#allocation5 + $0x5c] sm:$0xf]
    %v191 = vld [vmem:[#allocation5 + $0x60] sm:$0xf]
    %v192 = vld [vmem:[#allocation5 + $0x64] sm:$0xf]
    %v193 = vld [vmem:[#allocation5 + $0x68] sm:$0xf]
    %v194 = vld [vmem:[#allocation5 + $0x6c] sm:$0xf]
    %v195 = vld [vmem:[%s4] sm:$0x1]
    %v196 = vld [vmem:[%s4 + $0x1] sm:$0x1]
    %v197 = vld [vmem:[%s4 + $0x2] sm:$0x1]
    %v198 = vld [vmem:[%s4 + $0x3] sm:$0x1]
    %v199 = vld [vmem:[%s4 + $0x4] sm:$0x1]
    %v200 = vld [vmem:[%s4 + $0x5] sm:$0x1]
    %v201 = vld [vmem:[%s4 + $0x6] sm:$0x1]
    %v202 = vld [vmem:[%s4 + $0x7] sm:$0x1]
    %vm203 = vcmask 261120
    %v204 = vsel %vm203, %v159, 0.0
    %205 = vadd.xlane.f32.xlu0 %v204
    %v206 = vpop.xlane.xlu0 %205
    %v207 = vsel %vm203, %v160, 0.0
    %208 = vadd.xlane.f32.xlu0 %v207
    %v209 = vpop.xlane.xlu0 %208
    %v210 = vrcp.pop 32.0
    %v211 = vmul.f32 32.0, %v210
    %v212 = vsub.f32 1.0, %v211
    %v213 = vmul.f32 %v210, %v212
    %v214 = vadd.f32 %v210, %v213
    %vm215 = vweird.f32 %v210
    %v216 = vsel %vm215, %v210, %v214
    %v217 = vmul.f32 %v206, %v216
    %v218 = vmul.f32 %v209, %v216
    %v219 = vsub.f32 %v159, %v217
    %v220 = vsub.f32 %v160, %v218
    %v221 = vmul.f32 %v219, %v219
    %v222 = vmul.f32 %v220, %v220
    %v223 = vsel %vm203, %v221, 0.0
    %224 = vadd.xlane.f32.xlu0 %v223
    %v225 = vpop.xlane.xlu0 %224
    %v226 = vsel %vm203, %v222, 0.0
    %227 = vadd.xlane.f32.xlu0 %v226
    %v228 = vpop.xlane.xlu0 %227
    %v229 = vmul.f32 %v225, %v216
    %v230 = vmul.f32 %v228, %v216
    %v231 = vadd.f32 %v229, 1e-05
    %v232 = vadd.f32 %v230, 1e-05
    %v233 = vrsqrt.pop %v231
    %v234 = vmul.f32 %v233, %v231
    %v235 = vmul.f32 %v234, %v233
    %v236 = vmul.f32 0.5, %v235
    %v237 = vsub.f32 1.5, %v236
    %v238 = vmul.f32 %v233, %v237
    %vm239 = vweird.f32 %v231
    %vm240 = vweird.f32 %v233
    %vm241 = vmor %vm239, %vm240
    %v242 = vsel %vm241, %v233, %v238
    %v243 = vrsqrt.pop %v232
    %v244 = vmul.f32 %v243, %v232
    %v245 = vmul.f32 %v244, %v243
    %v246 = vmul.f32 0.5, %v245
    %v247 = vsub.f32 1.5, %v246
    %v248 = vmul.f32 %v243, %v247
    %vm249 = vweird.f32 %v232
    %vm250 = vweird.f32 %v243
    %vm251 = vmor %vm249, %vm250
    %v252 = vsel %vm251, %v243, %v248
    %v253 = vmul.f32 %v219, %v242
    %v254 = vmul.f32 %v220, %v252
    %v255 = vperm.slane %v195, 0
    %v256 = vmul.f32 %v253, %v255
    %v257 = vmul.f32 %v254, %v255
    %v258 = vperm.slane %v196, 0
    %v259 = vadd.f32 %v256, %v258
    %v260 = vadd.f32 %v257, %v258
    %v261 = vpack.c.bf16 %v260, %v259
    %v262 = vperm.slane %v197, 0
    %v267 = vunpack.c.l.b16 %v167
    %v268 = vunpack.c.l.b16 %v168
    %v269 = vunpack.c.l.b16 %v169
    %v270 = vunpack.c.l.b16 %v170
    %v271 = vpack.c.b16 %v268, %v267
    %v272 = vpack.c.b16 %v270, %v269
    %v276 = vsel %vm203, %v261, 0
    %278 = vmatpush.bf16.msra.mxu0 0
    %279 = vmatpush.bf16.msra.mxu0 0
    %280 = vmatpush.bf16.msra.mxu0 0
    %281 = vmatpush.bf16.msra.mxu0 0
    %282 = vmatpush.bf16.msra.mxu0 0
    %283 = vmatpush.bf16.msra.mxu0 0
    %284 = vmatpush.bf16.msra.mxu0 %v272
    %285 = vmatpush.bf16.msra.mxu0 %v271
    %286 = vmatmul.bf16.gmra.mxu0 %v276
    %v287 = vpop.f32.mrf.mxu0
    %v288 = vadd.f32 %v262, %v287
    %v289 = vpop.f32.mrf.mxu0
    %v290 = vadd.f32 %v262, %v289
    %291 = vdwg.mxu0
    %v292 = vpack.c.bf16 %v288, %v288
    %v293 = vpack.c.bf16 %v290, %v290
    %v295 = vunpack.c.l.b16 %v292
    %v296 = vpack.c.b16 %v295, %v295
    %297 = vrot.lane.b32.xlu0 %v296, 96
    %v298 = vpop.permute.xlu0 %297
    %vm299 = vcmask 130048
    %v301 = vsel %vm299, %v292, 0
    %v304 = vsel %vm299, %v298, 0
    %306 = vmatpush.bf16.xpose.msra.mxu0 0
    %307 = vmatpush.bf16.xpose.msra.mxu0 0
    %308 = vmatpush.bf16.xpose.msra.mxu0 0
    %309 = vmatpush.bf16.xpose.msra.mxu0 0
    %310 = vmatpush.bf16.xpose.msra.mxu0 0
    %311 = vmatpush.bf16.xpose.msra.mxu0 0
    %312 = vmatpush.bf16.xpose.msra.mxu0 0
    %313 = vmatpush.bf16.xpose.msra.mxu0 %v304
    %314 = vmatmul.bf16.gmra.mxu0 %v301
    %v315 = vpop.f32.mrf.mxu0
    %v316 = vadd.f32 0.0, %v315
    %v317 = vpop.f32.mrf.mxu0
    %318 = vdwg.mxu0
    %v319 = vmul.f32 %v316, 0.25
    %v320 = vadd.f32 %v319, %v166
    %vm321 = vcmask 64512
    %v322 = vsel %vm321, %v320, -inf
    %323 = vmax.xlane.f32.xlu0 %v322
    %v324 = vpop.xlane.xlu0 %323
    %v325 = vsub.f32 %v320, %v324
    %v326 = vmul.f32 %v325, 1.442695
    %v327 = vpow.pop %v326
    %v328 = vsel %vm321, %v327, 0.0
    %329 = vadd.xlane.f32.xlu0 %v328
    %v330 = vpop.xlane.xlu0 %329
    %v331 = vrcp.pop %v330
    %v332 = vmul.f32 %v327, %v331
    %v333 = vpack.c.bf16 %v332, %v332
    %334 = vrot.lane.b32.xlu0 %v296, 64
    %v335 = vpop.permute.xlu0 %334
    %v337 = vsel %vm321, %v333, 0
    %vm339 = vcmask 1043456
    %v341 = vsel %vm339, %v335, 0
    %343 = vmatpush.bf16.msra.mxu0 0
    %344 = vmatpush.bf16.msra.mxu0 0
    %345 = vmatpush.bf16.msra.mxu0 0
    %346 = vmatpush.bf16.msra.mxu0 0
    %347 = vmatpush.bf16.msra.mxu0 0
    %348 = vmatpush.bf16.msra.mxu0 0
    %349 = vmatpush.bf16.msra.mxu0 0
    %350 = vmatpush.bf16.msra.mxu0 %v341
    %351 = vmatmul.bf16.gmra.mxu0 %v337
    %v352 = vpop.f32.mrf.mxu0
    %v353 = vadd.f32 0.0, %v352
    %v354 = vpop.f32.mrf.mxu0
    %355 = vdwg.mxu0
    %v357 = vunpack.c.l.b16 %v293
    %v358 = vpack.c.b16 %v357, %v357
    %359 = vrot.lane.b32.xlu0 %v358, 96
    %v360 = vpop.permute.xlu0 %359
    %v362 = vsel %vm299, %v293, 0
    %v365 = vsel %vm299, %v360, 0
    %367 = vmatpush.bf16.xpose.msra.mxu0 0
    %368 = vmatpush.bf16.xpose.msra.mxu0 0
    %369 = vmatpush.bf16.xpose.msra.mxu0 0
    %370 = vmatpush.bf16.xpose.msra.mxu0 0
    %371 = vmatpush.bf16.xpose.msra.mxu0 0
    %372 = vmatpush.bf16.xpose.msra.mxu0 0
    %373 = vmatpush.bf16.xpose.msra.mxu0 0
    %374 = vmatpush.bf16.xpose.msra.mxu0 %v365
    %375 = vmatmul.bf16.gmra.mxu0 %v362
    %v376 = vpop.f32.mrf.mxu0
    %v377 = vadd.f32 0.0, %v376
    %v378 = vpop.f32.mrf.mxu0
    %379 = vdwg.mxu0
    %v380 = vmul.f32 %v377, 0.25
    %v381 = vadd.f32 %v380, %v166
    %v382 = vsel %vm321, %v381, -inf
    %383 = vmax.xlane.f32.xlu0 %v382
    %v384 = vpop.xlane.xlu0 %383
    %v385 = vsub.f32 %v381, %v384
    %v386 = vmul.f32 %v385, 1.442695
    %v387 = vpow.pop %v386
    %v388 = vsel %vm321, %v387, 0.0
    %389 = vadd.xlane.f32.xlu0 %v388
    %v390 = vpop.xlane.xlu0 %389
    %v391 = vrcp.pop %v390
    %v392 = vmul.f32 %v387, %v391
    %v393 = vpack.c.bf16 %v392, %v392
    %394 = vrot.lane.b32.xlu0 %v358, 64
    %v395 = vpop.permute.xlu0 %394
    %v397 = vsel %vm321, %v393, 0
    %v400 = vsel %vm339, %v395, 0
    %402 = vmatpush.bf16.msra.mxu0 0
    %403 = vmatpush.bf16.msra.mxu0 0
    %404 = vmatpush.bf16.msra.mxu0 0
    %405 = vmatpush.bf16.msra.mxu0 0
    %406 = vmatpush.bf16.msra.mxu0 0
    %407 = vmatpush.bf16.msra.mxu0 0
    %408 = vmatpush.bf16.msra.mxu0 0
    %409 = vmatpush.bf16.msra.mxu0 %v400
    %410 = vmatmul.bf16.gmra.mxu0 %v397
    %v411 = vpop.f32.mrf.mxu0
    %v412 = vadd.f32 0.0, %v411
    %v413 = vpop.f32.mrf.mxu0
    %414 = vdwg.mxu0
    %v415 = vpack.c.bf16 %v412, %v353
    %416 = vrot.lane.b32.xlu0 %v296, 112
    %v417 = vpop.permute.xlu0 %416
    %418 = vrot.lane.b32.xlu0 %v296, 80
    %v419 = vpop.permute.xlu0 %418
    %v421 = vsel %vm299, %v417, 0
    %v424 = vsel %vm299, %v419, 0
    %426 = vmatpush.bf16.xpose.msra.mxu0 0
    %427 = vmatpush.bf16.xpose.msra.mxu0 0
    %428 = vmatpush.bf16.xpose.msra.mxu0 0
    %429 = vmatpush.bf16.xpose.msra.mxu0 0
    %430 = vmatpush.bf16.xpose.msra.mxu0 0
    %431 = vmatpush.bf16.xpose.msra.mxu0 0
    %432 = vmatpush.bf16.xpose.msra.mxu0 0
    %433 = vmatpush.bf16.xpose.msra.mxu0 %v424
    %434 = vmatmul.bf16.gmra.mxu0 %v421
    %v435 = vpop.f32.mrf.mxu0
    %v436 = vadd.f32 0.0, %v435
    %v437 = vpop.f32.mrf.mxu0
    %438 = vdwg.mxu0
    %v439 = vmul.f32 %v436, 0.25
    %v440 = vadd.f32 %v439, %v166
    %v441 = vsel %vm321, %v440, -inf
    %442 = vmax.xlane.f32.xlu0 %v441
    %v443 = vpop.xlane.xlu0 %442
    %v444 = vsub.f32 %v440, %v443
    %v445 = vmul.f32 %v444, 1.442695
    %v446 = vpow.pop %v445
    %v447 = vsel %vm321, %v446, 0.0
    %448 = vadd.xlane.f32.xlu0 %v447
    %v449 = vpop.xlane.xlu0 %448
    %v450 = vrcp.pop %v449
    %v451 = vmul.f32 %v446, %v450
    %v452 = vpack.c.bf16 %v451, %v451
    %453 = vrot.lane.b32.xlu0 %v296, 48
    %v454 = vpop.permute.xlu0 %453
    %v456 = vsel %vm321, %v452, 0
    %v459 = vsel %vm339, %v454, 0
    %461 = vmatpush.bf16.msra.mxu0 0
    %462 = vmatpush.bf16.msra.mxu0 0
    %463 = vmatpush.bf16.msra.mxu0 0
    %464 = vmatpush.bf16.msra.mxu0 0
    %465 = vmatpush.bf16.msra.mxu0 0
    %466 = vmatpush.bf16.msra.mxu0 0
    %467 = vmatpush.bf16.msra.mxu0 0
    %468 = vmatpush.bf16.msra.mxu0 %v459
    %469 = vmatmul.bf16.gmra.mxu0 %v456
    %v470 = vpop.f32.mrf.mxu0
    %v471 = vadd.f32 0.0, %v470
    %v472 = vpop.f32.mrf.mxu0
    %473 = vdwg.mxu0
    %474 = vrot.lane.b32.xlu0 %v358, 112
    %v475 = vpop.permute.xlu0 %474
    %476 = vrot.lane.b32.xlu0 %v358, 80
    %v477 = vpop.permute.xlu0 %476
    %v479 = vsel %vm299, %v475, 0
    %v482 = vsel %vm299, %v477, 0
    %484 = vmatpush.bf16.xpose.msra.mxu0 0
    %485 = vmatpush.bf16.xpose.msra.mxu0 0
    %486 = vmatpush.bf16.xpose.msra.mxu0 0
    %487 = vmatpush.bf16.xpose.msra.mxu0 0
    %488 = vmatpush.bf16.xpose.msra.mxu0 0
    %489 = vmatpush.bf16.xpose.msra.mxu0 0
    %490 = vmatpush.bf16.xpose.msra.mxu0 0
    %491 = vmatpush.bf16.xpose.msra.mxu0 %v482
    %492 = vmatmul.bf16.gmra.mxu0 %v479
    %v493 = vpop.f32.mrf.mxu0
    %v494 = vadd.f32 0.0, %v493
    %v495 = vpop.f32.mrf.mxu0
    %496 = vdwg.mxu0
    %v497 = vmul.f32 %v494, 0.25
    %v498 = vadd.f32 %v497, %v166
    %v499 = vsel %vm321, %v498, -inf
    %500 = vmax.xlane.f32.xlu0 %v499
    %v501 = vpop.xlane.xlu0 %500
    %v502 = vsub.f32 %v498, %v501
    %v503 = vmul.f32 %v502, 1.442695
    %v504 = vpow.pop %v503
    %v505 = vsel %vm321, %v504, 0.0
    %506 = vadd.xlane.f32.xlu0 %v505
    %v507 = vpop.xlane.xlu0 %506
    %v508 = vrcp.pop %v507
    %v509 = vmul.f32 %v504, %v508
    %v510 = vpack.c.bf16 %v509, %v509
    %511 = vrot.lane.b32.xlu0 %v358, 48
    %v512 = vpop.permute.xlu0 %511
    %v514 = vsel %vm321, %v510, 0
    %v517 = vsel %vm339, %v512, 0
    %519 = vmatpush.bf16.msra.mxu0 0
    %520 = vmatpush.bf16.msra.mxu0 0
    %521 = vmatpush.bf16.msra.mxu0 0
    %522 = vmatpush.bf16.msra.mxu0 0
    %523 = vmatpush.bf16.msra.mxu0 0
    %524 = vmatpush.bf16.msra.mxu0 0
    %525 = vmatpush.bf16.msra.mxu0 0
    %526 = vmatpush.bf16.msra.mxu0 %v517
    %527 = vmatmul.bf16.gmra.mxu0 %v514
    %v528 = vpop.f32.mrf.mxu0
    %v529 = vadd.f32 0.0, %v528
    %v530 = vpop.f32.mrf.mxu0
    %531 = vdwg.mxu0
    %v532 = vpack.c.bf16 %v529, %v471
    %v535 = vunpack.c.l.b16 %v173
    %v536 = vunpack.c.l.b16 %v174
    %v537 = vpack.c.b16 %v536, %v535
    %v540 = vsel %vm299, %v532, 0
    %542 = vmatpush.bf16.msra.mxu0 0
    %543 = vmatpush.bf16.msra.mxu0 0
    %544 = vmatpush.bf16.msra.mxu0 0
    %545 = vmatpush.bf16.msra.mxu0 0
    %546 = vmatpush.bf16.msra.mxu0 0
    %547 = vmatpush.bf16.msra.mxu0 0
    %548 = vmatpush.bf16.msra.mxu0 0
    %549 = vmatpush.bf16.msra.mxu0 %v537
    %550 = vmatmul.bf16.gmra.mxu0 %v540
    %v551 = vpop.f32.mrf.mxu0
    %v552 = vadd.f32 0.0, %v551
    %v553 = vpop.f32.mrf.mxu0
    %v554 = vadd.f32 0.0, %v553
    %555 = vdwg.mxu0
    %v558 = vunpack.c.l.b16 %v171
    %v559 = vunpack.c.l.b16 %v172
    %v560 = vpack.c.b16 %v559, %v558
    %v563 = vsel %vm299, %v415, 0
    %565 = vmatpush.bf16.msra.mxu0 0
    %566 = vmatpush.bf16.msra.mxu0 0
    %567 = vmatpush.bf16.msra.mxu0 0
    %568 = vmatpush.bf16.msra.mxu0 0
    %569 = vmatpush.bf16.msra.mxu0 0
    %570 = vmatpush.bf16.msra.mxu0 0
    %571 = vmatpush.bf16.msra.mxu0 0
    %572 = vmatpush.bf16.msra.mxu0 %v560
    %573 = vmatmul.bf16.gmra.mxu0 %v563
    %v574 = vpop.f32.mrf.mxu0
    %v575 = vadd.f32 %v552, %v574
    %v576 = vpop.f32.mrf.mxu0
    %v577 = vadd.f32 %v554, %v576
    %578 = vdwg.mxu0
    %v579 = vadd.f32 %v159, %v575
    %v580 = vadd.f32 %v160, %v577
    %v581 = vperm.slane %v198, 0
    %v582 = vadd.f32 %v579, %v581
    %v583 = vadd.f32 %v580, %v581
    %v584 = vsel %vm203, %v582, 0.0
    %585 = vadd.xlane.f32.xlu0 %v584
    %v586 = vpop.xlane.xlu0 %585
    %v587 = vsel %vm203, %v583, 0.0
    %588 = vadd.xlane.f32.xlu0 %v587
    %v589 = vpop.xlane.xlu0 %588
    %v590 = vmul.f32 %v586, %v216
    %v591 = vmul.f32 %v589, %v216
    %v592 = vsub.f32 %v582, %v590
    %v593 = vsub.f32 %v583, %v591
    %v594 = vmul.f32 %v592, %v592
    %v595 = vmul.f32 %v593, %v593
    %v596 = vsel %vm203, %v594, 0.0
    %597 = vadd.xlane.f32.xlu0 %v596
    %v598 = vpop.xlane.xlu0 %597
    %v599 = vsel %vm203, %v595, 0.0
    %600 = vadd.xlane.f32.xlu0 %v599
    %v601 = vpop.xlane.xlu0 %600
    %v602 = vmul.f32 %v598, %v216
    %v603 = vmul.f32 %v601, %v216
    %v604 = vadd.f32 %v602, 1e-05
    %v605 = vadd.f32 %v603, 1e-05
    %v606 = vrsqrt.pop %v604
    %v607 = vmul.f32 %v606, %v604
    %v608 = vmul.f32 %v607, %v606
    %v609 = vmul.f32 0.5, %v608
    %v610 = vsub.f32 1.5, %v609
    %v611 = vmul.f32 %v606, %v610
    %vm612 = vweird.f32 %v604
    %vm613 = vweird.f32 %v606
    %vm614 = vmor %vm612, %vm613
    %v615 = vsel %vm614, %v606, %v611
    %v616 = vrsqrt.pop %v605
    %v617 = vmul.f32 %v616, %v605
    %v618 = vmul.f32 %v617, %v616
    %v619 = vmul.f32 0.5, %v618
    %v620 = vsub.f32 1.5, %v619
    %v621 = vmul.f32 %v616, %v620
    %vm622 = vweird.f32 %v605
    %vm623 = vweird.f32 %v616
    %vm624 = vmor %vm622, %vm623
    %v625 = vsel %vm624, %v616, %v621
    %v626 = vmul.f32 %v592, %v615
    %v627 = vmul.f32 %v593, %v625
    %v628 = vperm.slane %v199, 0
    %v629 = vmul.f32 %v626, %v628
    %v630 = vmul.f32 %v627, %v628
    %v631 = vperm.slane %v200, 0
    %v632 = vadd.f32 %v629, %v631
    %v633 = vadd.f32 %v630, %v631
    %v634 = vpack.c.bf16 %v633, %v632
    %v635 = vperm.slane %v201, 0
    %v640 = vunpack.c.l.b16 %v175
    %v641 = vunpack.c.l.b16 %v176
    %v642 = vunpack.c.l.b16 %v177
    %v643 = vunpack.c.l.b16 %v178
    %v644 = vpack.c.b16 %v641, %v640
    %v645 = vpack.c.b16 %v643, %v642
    %v649 = vsel %vm203, %v634, 0
    %651 = vmatpush.bf16.msra.mxu0 0
    %652 = vmatpush.bf16.msra.mxu0 0
    %653 = vmatpush.bf16.msra.mxu0 0
    %654 = vmatpush.bf16.msra.mxu0 0
    %655 = vmatpush.bf16.msra.mxu0 0
    %656 = vmatpush.bf16.msra.mxu0 0
    %657 = vmatpush.bf16.msra.mxu0 %v645
    %658 = vmatpush.bf16.msra.mxu0 %v644
    %659 = vmatmul.bf16.gmra.mxu0 %v649
    %v660 = vpop.f32.mrf.mxu0
    %v661 = vadd.f32 %v635, %v660
    %v662 = vpop.f32.mrf.mxu0
    %v663 = vadd.f32 %v635, %v662
    %664 = vdwg.mxu0
    %v665 = vmul.f32 %v661, 0.5
    %v666 = vmul.f32 %v663, 0.5
    %v667 = vmul.f32 %v661, 0.044715
    %v668 = vmul.f32 %v663, 0.044715
    %v669 = vmul.f32 %v667, %v661
    %v670 = vmul.f32 %v668, %v663
    %v671 = vmul.f32 %v669, %v661
    %v672 = vmul.f32 %v670, %v663
    %v673 = vadd.f32 %v661, %v671
    %v674 = vadd.f32 %v663, %v672
    %v675 = vmul.f32 %v673, 0.7978846
    %v676 = vmul.f32 %v674, 0.7978846
    %v677 = vtanh.pop %v675
    %v678 = vtanh.pop %v676
    %v679 = vadd.f32 %v677, 1.0
    %v680 = vadd.f32 %v678, 1.0
    %v681 = vmul.f32 %v665, %v679
    %v682 = vmul.f32 %v666, %v680
    %v683 = vpack.c.bf16 %v682, %v681
    %v700 = vunpack.c.l.b16 %v179
    %v701 = vunpack.c.l.b16 %v180
    %v702 = vunpack.c.l.b16 %v181
    %v703 = vunpack.c.l.b16 %v182
    %v704 = vunpack.c.l.b16 %v183
    %v705 = vunpack.c.l.b16 %v184
    %v706 = vunpack.c.l.b16 %v185
    %v707 = vunpack.c.l.b16 %v186
    %v708 = vunpack.c.l.b16 %v187
    %v709 = vunpack.c.l.b16 %v188
    %v710 = vunpack.c.l.b16 %v189
    %v711 = vunpack.c.l.b16 %v190
    %v712 = vunpack.c.l.b16 %v191
    %v713 = vunpack.c.l.b16 %v192
    %v714 = vunpack.c.l.b16 %v193
    %v715 = vunpack.c.l.b16 %v194
    %v716 = vpack.c.b16 %v701, %v700
    %v717 = vpack.c.b16 %v703, %v702
    %v718 = vpack.c.b16 %v705, %v704
    %v719 = vpack.c.b16 %v707, %v706
    %v720 = vpack.c.b16 %v709, %v708
    %v721 = vpack.c.b16 %v711, %v710
    %v722 = vpack.c.b16 %v713, %v712
    %v723 = vpack.c.b16 %v715, %v714
    %732 = vmatpush.bf16.msra.mxu0 %v723
    %733 = vmatpush.bf16.msra.mxu0 %v722
    %734 = vmatpush.bf16.msra.mxu0 %v721
    %735 = vmatpush.bf16.msra.mxu0 %v720
    %736 = vmatpush.bf16.msra.mxu0 %v719
    %737 = vmatpush.bf16.msra.mxu0 %v718
    %738 = vmatpush.bf16.msra.mxu0 %v717
    %739 = vmatpush.bf16.msra.mxu0 %v716
    %740 = vmatmul.bf16.gmra.mxu0 %v683
    %v741 = vpop.f32.mrf.mxu0
    %v742 = vadd.f32 0.0, %v741
    %v743 = vpop.f32.mrf.mxu0
    %v744 = vadd.f32 0.0, %v743
    %745 = vdwg.mxu0
    %v746 = vadd.f32 %v582, %v742
    %v747 = vadd.f32 %v583, %v744
    %v748 = vperm.slane %v202, 0
    %v749 = vadd.f32 %v746, %v748
    %v750 = vadd.f32 %v747, %v748
    %v751 = vld [vmem:[#allocation5 + $0x70] sm:$0xf]
    %v752 = vld [vmem:[#allocation5 + $0x74] sm:$0xf]
    %v753 = vld [vmem:[#allocation5 + $0x78] sm:$0xf]
    %v754 = vld [vmem:[#allocation5 + $0x7c] sm:$0xf]
    %v755 = vld [vmem:[#allocation5 + $0x80] sm:$0xf]
    %v756 = vld [vmem:[#allocation5 + $0x84] sm:$0xf]
    %v757 = vld [vmem:[#allocation5 + $0x88] sm:$0xf]
    %v758 = vld [vmem:[#allocation5 + $0x8c] sm:$0xf]
    %v759 = vld [vmem:[#allocation5 + $0x90] sm:$0xf]
    %v760 = vld [vmem:[#allocation5 + $0x94] sm:$0xf]
    %v761 = vld [vmem:[#allocation5 + $0x98] sm:$0xf]
    %v762 = vld [vmem:[#allocation5 + $0x9c] sm:$0xf]
    %v763 = vld [vmem:[#allocation5 + $0xa0] sm:$0xf]
    %v764 = vld [vmem:[#allocation5 + $0xa4] sm:$0xf]
    %v765 = vld [vmem:[#allocation5 + $0xa8] sm:$0xf]
    %v766 = vld [vmem:[#allocation5 + $0xac] sm:$0xf]
    %v767 = vld [vmem:[#allocation5 + $0xb0] sm:$0xf]
    %v768 = vld [vmem:[#allocation5 + $0xb4] sm:$0xf]
    %v769 = vld [vmem:[#allocation5 + $0xb8] sm:$0xf]
    %v770 = vld [vmem:[#allocation5 + $0xbc] sm:$0xf]
    %v771 = vld [vmem:[#allocation5 + $0xc0] sm:$0xf]
    %v772 = vld [vmem:[#allocation5 + $0xc4] sm:$0xf]
    %v773 = vld [vmem:[#allocation5 + $0xc8] sm:$0xf]
    %v774 = vld [vmem:[#allocation5 + $0xcc] sm:$0xf]
    %v775 = vld [vmem:[#allocation5 + $0xd0] sm:$0xf]
    %v776 = vld [vmem:[#allocation5 + $0xd4] sm:$0xf]
    %v777 = vld [vmem:[#allocation5 + $0xd8] sm:$0xf]
    %v778 = vld [vmem:[#allocation5 + $0xdc] sm:$0xf]
    %v779 = vld [vmem:[%s4 + $0x8] sm:$0x1]
    %v780 = vld [vmem:[%s4 + $0x9] sm:$0x1]
    %v781 = vld [vmem:[%s4 + $0xa] sm:$0x1]
    %v782 = vld [vmem:[%s4 + $0xb] sm:$0x1]
    %v783 = vld [vmem:[%s4 + $0xc] sm:$0x1]
    %v784 = vld [vmem:[%s4 + $0xd] sm:$0x1]
    %v785 = vld [vmem:[%s4 + $0xe] sm:$0x1]
    %v786 = vld [vmem:[%s4 + $0xf] sm:$0x1]
    %v787 = vsel %vm203, %v749, 0.0
    %788 = vadd.xlane.f32.xlu0 %v787
    %v789 = vpop.xlane.xlu0 %788
    %v790 = vsel %vm203, %v750, 0.0
    %791 = vadd.xlane.f32.xlu0 %v790
    %v792 = vpop.xlane.xlu0 %791
    %v793 = vmul.f32 %v789, %v216
    %v794 = vmul.f32 %v792, %v216
    %v795 = vsub.f32 %v749, %v793
    %v796 = vsub.f32 %v750, %v794
    %v797 = vmul.f32 %v795, %v795
    %v798 = vmul.f32 %v796, %v796
    %v799 = vsel %vm203, %v797, 0.0
    %800 = vadd.xlane.f32.xlu0 %v799
    %v801 = vpop.xlane.xlu0 %800
    %v802 = vsel %vm203, %v798, 0.0
    %803 = vadd.xlane.f32.xlu0 %v802
    %v804 = vpop.xlane.xlu0 %803
    %v805 = vmul.f32 %v801, %v216
    %v806 = vmul.f32 %v804, %v216
    %v807 = vadd.f32 %v805, 1e-05
    %v808 = vadd.f32 %v806, 1e-05
    %v809 = vrsqrt.pop %v807
    %v810 = vmul.f32 %v809, %v807
    %v811 = vmul.f32 %v810, %v809
    %v812 = vmul.f32 0.5, %v811
    %v813 = vsub.f32 1.5, %v812
    %v814 = vmul.f32 %v809, %v813
    %vm815 = vweird.f32 %v807
    %vm816 = vweird.f32 %v809
    %vm817 = vmor %vm815, %vm816
    %v818 = vsel %vm817, %v809, %v814
    %v819 = vrsqrt.pop %v808
    %v820 = vmul.f32 %v819, %v808
    %v821 = vmul.f32 %v820, %v819
    %v822 = vmul.f32 0.5, %v821
    %v823 = vsub.f32 1.5, %v822
    %v824 = vmul.f32 %v819, %v823
    %vm825 = vweird.f32 %v808
    %vm826 = vweird.f32 %v819
    %vm827 = vmor %vm825, %vm826
    %v828 = vsel %vm827, %v819, %v824
    %v829 = vmul.f32 %v795, %v818
    %v830 = vmul.f32 %v796, %v828
    %v831 = vperm.slane %v779, 0
    %v832 = vmul.f32 %v829, %v831
    %v833 = vmul.f32 %v830, %v831
    %v834 = vperm.slane %v780, 0
    %v835 = vadd.f32 %v832, %v834
    %v836 = vadd.f32 %v833, %v834
    %v837 = vpack.c.bf16 %v836, %v835
    %v838 = vperm.slane %v781, 0
    %v843 = vunpack.c.l.b16 %v751
    %v844 = vunpack.c.l.b16 %v752
    %v845 = vunpack.c.l.b16 %v753
    %v846 = vunpack.c.l.b16 %v754
    %v847 = vpack.c.b16 %v844, %v843
    %v848 = vpack.c.b16 %v846, %v845
    %v852 = vsel %vm203, %v837, 0
    %854 = vmatpush.bf16.msra.mxu0 0
    %855 = vmatpush.bf16.msra.mxu0 0
    %856 = vmatpush.bf16.msra.mxu0 0
    %857 = vmatpush.bf16.msra.mxu0 0
    %858 = vmatpush.bf16.msra.mxu0 0
    %859 = vmatpush.bf16.msra.mxu0 0
    %860 = vmatpush.bf16.msra.mxu0 %v848
    %861 = vmatpush.bf16.msra.mxu0 %v847
    %862 = vmatmul.bf16.gmra.mxu0 %v852
    %v863 = vpop.f32.mrf.mxu0
    %v864 = vadd.f32 %v838, %v863
    %v865 = vpop.f32.mrf.mxu0
    %v866 = vadd.f32 %v838, %v865
    %867 = vdwg.mxu0
    %v868 = vpack.c.bf16 %v864, %v864
    %v869 = vpack.c.bf16 %v866, %v866
    %v871 = vunpack.c.l.b16 %v868
    %v872 = vpack.c.b16 %v871, %v871
    %873 = vrot.lane.b32.xlu0 %v872, 96
    %v874 = vpop.permute.xlu0 %873
    %v876 = vsel %vm299, %v868, 0
    %v879 = vsel %vm299, %v874, 0
    %881 = vmatpush.bf16.xpose.msra.mxu0 0
    %882 = vmatpush.bf16.xpose.msra.mxu0 0
    %883 = vmatpush.bf16.xpose.msra.mxu0 0
    %884 = vmatpush.bf16.xpose.msra.mxu0 0
    %885 = vmatpush.bf16.xpose.msra.mxu0 0
    %886 = vmatpush.bf16.xpose.msra.mxu0 0
    %887 = vmatpush.bf16.xpose.msra.mxu0 0
    %888 = vmatpush.bf16.xpose.msra.mxu0 %v879
    %889 = vmatmul.bf16.gmra.mxu0 %v876
    %v890 = vpop.f32.mrf.mxu0
    %v891 = vadd.f32 0.0, %v890
    %v892 = vpop.f32.mrf.mxu0
    %893 = vdwg.mxu0
    %v894 = vmul.f32 %v891, 0.25
    %v895 = vadd.f32 %v894, %v166
    %v896 = vsel %vm321, %v895, -inf
    %897 = vmax.xlane.f32.xlu0 %v896
    %v898 = vpop.xlane.xlu0 %897
    %v899 = vsub.f32 %v895, %v898
    %v900 = vmul.f32 %v899, 1.442695
    %v901 = vpow.pop %v900
    %v902 = vsel %vm321, %v901, 0.0
    %903 = vadd.xlane.f32.xlu0 %v902
    %v904 = vpop.xlane.xlu0 %903
    %v905 = vrcp.pop %v904
    %v906 = vmul.f32 %v901, %v905
    %v907 = vpack.c.bf16 %v906, %v906
    %908 = vrot.lane.b32.xlu0 %v872, 64
    %v909 = vpop.permute.xlu0 %908
    %v911 = vsel %vm321, %v907, 0
    %v914 = vsel %vm339, %v909, 0
    %916 = vmatpush.bf16.msra.mxu0 0
    %917 = vmatpush.bf16.msra.mxu0 0
    %918 = vmatpush.bf16.msra.mxu0 0
    %919 = vmatpush.bf16.msra.mxu0 0
    %920 = vmatpush.bf16.msra.mxu0 0
    %921 = vmatpush.bf16.msra.mxu0 0
    %922 = vmatpush.bf16.msra.mxu0 0
    %923 = vmatpush.bf16.msra.mxu0 %v914
    %924 = vmatmul.bf16.gmra.mxu0 %v911
    %v925 = vpop.f32.mrf.mxu0
    %v926 = vadd.f32 0.0, %v925
    %v927 = vpop.f32.mrf.mxu0
    %928 = vdwg.mxu0
    %v930 = vunpack.c.l.b16 %v869
    %v931 = vpack.c.b16 %v930, %v930
    %932 = vrot.lane.b32.xlu0 %v931, 96
    %v933 = vpop.permute.xlu0 %932
    %v935 = vsel %vm299, %v869, 0
    %v938 = vsel %vm299, %v933, 0
    %940 = vmatpush.bf16.xpose.msra.mxu0 0
    %941 = vmatpush.bf16.xpose.msra.mxu0 0
    %942 = vmatpush.bf16.xpose.msra.mxu0 0
    %943 = vmatpush.bf16.xpose.msra.mxu0 0
    %944 = vmatpush.bf16.xpose.msra.mxu0 0
    %945 = vmatpush.bf16.xpose.msra.mxu0 0
    %946 = vmatpush.bf16.xpose.msra.mxu0 0
    %947 = vmatpush.bf16.xpose.msra.mxu0 %v938
    %948 = vmatmul.bf16.gmra.mxu0 %v935
    %v949 = vpop.f32.mrf.mxu0
    %v950 = vadd.f32 0.0, %v949
    %v951 = vpop.f32.mrf.mxu0
    %952 = vdwg.mxu0
    %v953 = vmul.f32 %v950, 0.25
    %v954 = vadd.f32 %v953, %v166
    %v955 = vsel %vm321, %v954, -inf
    %956 = vmax.xlane.f32.xlu0 %v955
    %v957 = vpop.xlane.xlu0 %956
    %v958 = vsub.f32 %v954, %v957
    %v959 = vmul.f32 %v958, 1.442695
    %v960 = vpow.pop %v959
    %v961 = vsel %vm321, %v960, 0.0
    %962 = vadd.xlane.f32.xlu0 %v961
    %v963 = vpop.xlane.xlu0 %962
    %v964 = vrcp.pop %v963
    %v965 = vmul.f32 %v960, %v964
    %v966 = vpack.c.bf16 %v965, %v965
    %967 = vrot.lane.b32.xlu0 %v931, 64
    %v968 = vpop.permute.xlu0 %967
    %v970 = vsel %vm321, %v966, 0
    %v973 = vsel %vm339, %v968, 0
    %975 = vmatpush.bf16.msra.mxu0 0
    %976 = vmatpush.bf16.msra.mxu0 0
    %977 = vmatpush.bf16.msra.mxu0 0
    %978 = vmatpush.bf16.msra.mxu0 0
    %979 = vmatpush.bf16.msra.mxu0 0
    %980 = vmatpush.bf16.msra.mxu0 0
    %981 = vmatpush.bf16.msra.mxu0 0
    %982 = vmatpush.bf16.msra.mxu0 %v973
    %983 = vmatmul.bf16.gmra.mxu0 %v970
    %v984 = vpop.f32.mrf.mxu0
    %v985 = vadd.f32 0.0, %v984
    %v986 = vpop.f32.mrf.mxu0
    %987 = vdwg.mxu0
    %v988 = vpack.c.bf16 %v985, %v926
    %989 = vrot.lane.b32.xlu0 %v872, 112
    %v990 = vpop.permute.xlu0 %989
    %991 = vrot.lane.b32.xlu0 %v872, 80
    %v992 = vpop.permute.xlu0 %991
    %v994 = vsel %vm299, %v990, 0
    %v997 = vsel %vm299, %v992, 0
    %999 = vmatpush.bf16.xpose.msra.mxu0 0
    %1000 = vmatpush.bf16.xpose.msra.mxu0 0
    %1001 = vmatpush.bf16.xpose.msra.mxu0 0
    %1002 = vmatpush.bf16.xpose.msra.mxu0 0
    %1003 = vmatpush.bf16.xpose.msra.mxu0 0
    %1004 = vmatpush.bf16.xpose.msra.mxu0 0
    %1005 = vmatpush.bf16.xpose.msra.mxu0 0
    %1006 = vmatpush.bf16.xpose.msra.mxu0 %v997
    %1007 = vmatmul.bf16.gmra.mxu0 %v994
    %v1008 = vpop.f32.mrf.mxu0
    %v1009 = vadd.f32 0.0, %v1008
    %v1010 = vpop.f32.mrf.mxu0
    %1011 = vdwg.mxu0
    %v1012 = vmul.f32 %v1009, 0.25
    %v1013 = vadd.f32 %v1012, %v166
    %v1014 = vsel %vm321, %v1013, -inf
    %1015 = vmax.xlane.f32.xlu0 %v1014
    %v1016 = vpop.xlane.xlu0 %1015
    %v1017 = vsub.f32 %v1013, %v1016
    %v1018 = vmul.f32 %v1017, 1.442695
    %v1019 = vpow.pop %v1018
    %v1020 = vsel %vm321, %v1019, 0.0
    %1021 = vadd.xlane.f32.xlu0 %v1020
    %v1022 = vpop.xlane.xlu0 %1021
    %v1023 = vrcp.pop %v1022
    %v1024 = vmul.f32 %v1019, %v1023
    %v1025 = vpack.c.bf16 %v1024, %v1024
    %1026 = vrot.lane.b32.xlu0 %v872, 48
    %v1027 = vpop.permute.xlu0 %1026
    %v1029 = vsel %vm321, %v1025, 0
    %v1032 = vsel %vm339, %v1027, 0
    %1034 = vmatpush.bf16.msra.mxu0 0
    %1035 = vmatpush.bf16.msra.mxu0 0
    %1036 = vmatpush.bf16.msra.mxu0 0
    %1037 = vmatpush.bf16.msra.mxu0 0
    %1038 = vmatpush.bf16.msra.mxu0 0
    %1039 = vmatpush.bf16.msra.mxu0 0
    %1040 = vmatpush.bf16.msra.mxu0 0
    %1041 = vmatpush.bf16.msra.mxu0 %v1032
    %1042 = vmatmul.bf16.gmra.mxu0 %v1029
    %v1043 = vpop.f32.mrf.mxu0
    %v1044 = vadd.f32 0.0, %v1043
    %v1045 = vpop.f32.mrf.mxu0
    %1046 = vdwg.mxu0
    %1047 = vrot.lane.b32.xlu0 %v931, 112
    %v1048 = vpop.permute.xlu0 %1047
    %1049 = vrot.lane.b32.xlu0 %v931, 80
    %v1050 = vpop.permute.xlu0 %1049
    %v1052 = vsel %vm299, %v1048, 0
    %v1055 = vsel %vm299, %v1050, 0
    %1057 = vmatpush.bf16.xpose.msra.mxu0 0
    %1058 = vmatpush.bf16.xpose.msra.mxu0 0
    %1059 = vmatpush.bf16.xpose.msra.mxu0 0
    %1060 = vmatpush.bf16.xpose.msra.mxu0 0
    %1061 = vmatpush.bf16.xpose.msra.mxu0 0
    %1062 = vmatpush.bf16.xpose.msra.mxu0 0
    %1063 = vmatpush.bf16.xpose.msra.mxu0 0
    %1064 = vmatpush.bf16.xpose.msra.mxu0 %v1055
    %1065 = vmatmul.bf16.gmra.mxu0 %v1052
    %v1066 = vpop.f32.mrf.mxu0
    %v1067 = vadd.f32 0.0, %v1066
    %v1068 = vpop.f32.mrf.mxu0
    %1069 = vdwg.mxu0
    %v1070 = vmul.f32 %v1067, 0.25
    %v1071 = vadd.f32 %v1070, %v166
    %v1072 = vsel %vm321, %v1071, -inf
    %1073 = vmax.xlane.f32.xlu0 %v1072
    %v1074 = vpop.xlane.xlu0 %1073
    %v1075 = vsub.f32 %v1071, %v1074
    %v1076 = vmul.f32 %v1075, 1.442695
    %v1077 = vpow.pop %v1076
    %v1078 = vsel %vm321, %v1077, 0.0
    %1079 = vadd.xlane.f32.xlu0 %v1078
    %v1080 = vpop.xlane.xlu0 %1079
    %v1081 = vrcp.pop %v1080
    %v1082 = vmul.f32 %v1077, %v1081
    %v1083 = vpack.c.bf16 %v1082, %v1082
    %1084 = vrot.lane.b32.xlu0 %v931, 48
    %v1085 = vpop.permute.xlu0 %1084
    %v1087 = vsel %vm321, %v1083, 0
    %v1090 = vsel %vm339, %v1085, 0
    %1092 = vmatpush.bf16.msra.mxu0 0
    %1093 = vmatpush.bf16.msra.mxu0 0
    %1094 = vmatpush.bf16.msra.mxu0 0
    %1095 = vmatpush.bf16.msra.mxu0 0
    %1096 = vmatpush.bf16.msra.mxu0 0
    %1097 = vmatpush.bf16.msra.mxu0 0
    %1098 = vmatpush.bf16.msra.mxu0 0
    %1099 = vmatpush.bf16.msra.mxu0 %v1090
    %1100 = vmatmul.bf16.gmra.mxu0 %v1087
    %v1101 = vpop.f32.mrf.mxu0
    %v1102 = vadd.f32 0.0, %v1101
    %v1103 = vpop.f32.mrf.mxu0
    %1104 = vdwg.mxu0
    %v1105 = vpack.c.bf16 %v1102, %v1044
    %v1108 = vunpack.c.l.b16 %v757
    %v1109 = vunpack.c.l.b16 %v758
    %v1110 = vpack.c.b16 %v1109, %v1108
    %v1113 = vsel %vm299, %v1105, 0
    %1115 = vmatpush.bf16.msra.mxu0 0
    %1116 = vmatpush.bf16.msra.mxu0 0
    %1117 = vmatpush.bf16.msra.mxu0 0
    %1118 = vmatpush.bf16.msra.mxu0 0
    %1119 = vmatpush.bf16.msra.mxu0 0
    %1120 = vmatpush.bf16.msra.mxu0 0
    %1121 = vmatpush.bf16.msra.mxu0 0
    %1122 = vmatpush.bf16.msra.mxu0 %v1110
    %1123 = vmatmul.bf16.gmra.mxu0 %v1113
    %v1124 = vpop.f32.mrf.mxu0
    %v1125 = vadd.f32 0.0, %v1124
    %v1126 = vpop.f32.mrf.mxu0
    %v1127 = vadd.f32 0.0, %v1126
    %1128 = vdwg.mxu0
    %v1131 = vunpack.c.l.b16 %v755
    %v1132 = vunpack.c.l.b16 %v756
    %v1133 = vpack.c.b16 %v1132, %v1131
    %v1136 = vsel %vm299, %v988, 0
    %1138 = vmatpush.bf16.msra.mxu0 0
    %1139 = vmatpush.bf16.msra.mxu0 0
    %1140 = vmatpush.bf16.msra.mxu0 0
    %1141 = vmatpush.bf16.msra.mxu0 0
    %1142 = vmatpush.bf16.msra.mxu0 0
    %1143 = vmatpush.bf16.msra.mxu0 0
    %1144 = vmatpush.bf16.msra.mxu0 0
    %1145 = vmatpush.bf16.msra.mxu0 %v1133
    %1146 = vmatmul.bf16.gmra.mxu0 %v1136
    %v1147 = vpop.f32.mrf.mxu0
    %v1148 = vadd.f32 %v1125, %v1147
    %v1149 = vpop.f32.mrf.mxu0
    %v1150 = vadd.f32 %v1127, %v1149
    %1151 = vdwg.mxu0
    %v1152 = vadd.f32 %v749, %v1148
    %v1153 = vadd.f32 %v750, %v1150
    %v1154 = vperm.slane %v782, 0
    %v1155 = vadd.f32 %v1152, %v1154
    %v1156 = vadd.f32 %v1153, %v1154
    %v1157 = vsel %vm203, %v1155, 0.0
    %1158 = vadd.xlane.f32.xlu0 %v1157
    %v1159 = vpop.xlane.xlu0 %1158
    %v1160 = vsel %vm203, %v1156, 0.0
    %1161 = vadd.xlane.f32.xlu0 %v1160
    %v1162 = vpop.xlane.xlu0 %1161
    %v1163 = vmul.f32 %v1159, %v216
    %v1164 = vmul.f32 %v1162, %v216
    %v1165 = vsub.f32 %v1155, %v1163
    %v1166 = vsub.f32 %v1156, %v1164
    %v1167 = vmul.f32 %v1165, %v1165
    %v1168 = vmul.f32 %v1166, %v1166
    %v1169 = vsel %vm203, %v1167, 0.0
    %1170 = vadd.xlane.f32.xlu0 %v1169
    %v1171 = vpop.xlane.xlu0 %1170
    %v1172 = vsel %vm203, %v1168, 0.0
    %1173 = vadd.xlane.f32.xlu0 %v1172
    %v1174 = vpop.xlane.xlu0 %1173
    %v1175 = vmul.f32 %v1171, %v216
    %v1176 = vmul.f32 %v1174, %v216
    %v1177 = vadd.f32 %v1175, 1e-05
    %v1178 = vadd.f32 %v1176, 1e-05
    %v1179 = vrsqrt.pop %v1177
    %v1180 = vmul.f32 %v1179, %v1177
    %v1181 = vmul.f32 %v1180, %v1179
    %v1182 = vmul.f32 0.5, %v1181
    %v1183 = vsub.f32 1.5, %v1182
    %v1184 = vmul.f32 %v1179, %v1183
    %vm1185 = vweird.f32 %v1177
    %vm1186 = vweird.f32 %v1179
    %vm1187 = vmor %vm1185, %vm1186
    %v1188 = vsel %vm1187, %v1179, %v1184
    %v1189 = vrsqrt.pop %v1178
    %v1190 = vmul.f32 %v1189, %v1178
    %v1191 = vmul.f32 %v1190, %v1189
    %v1192 = vmul.f32 0.5, %v1191
    %v1193 = vsub.f32 1.5, %v1192
    %v1194 = vmul.f32 %v1189, %v1193
    %vm1195 = vweird.f32 %v1178
    %vm1196 = vweird.f32 %v1189
    %vm1197 = vmor %vm1195, %vm1196
    %v1198 = vsel %vm1197, %v1189, %v1194
    %v1199 = vmul.f32 %v1165, %v1188
    %v1200 = vmul.f32 %v1166, %v1198
    %v1201 = vperm.slane %v783, 0
    %v1202 = vmul.f32 %v1199, %v1201
    %v1203 = vmul.f32 %v1200, %v1201
    %v1204 = vperm.slane %v784, 0
    %v1205 = vadd.f32 %v1202, %v1204
    %v1206 = vadd.f32 %v1203, %v1204
    %v1207 = vpack.c.bf16 %v1206, %v1205
    %v1208 = vperm.slane %v785, 0
    %v1213 = vunpack.c.l.b16 %v759
    %v1214 = vunpack.c.l.b16 %v760
    %v1215 = vunpack.c.l.b16 %v761
    %v1216 = vunpack.c.l.b16 %v762
    %v1217 = vpack.c.b16 %v1214, %v1213
    %v1218 = vpack.c.b16 %v1216, %v1215
    %v1222 = vsel %vm203, %v1207, 0
    %1224 = vmatpush.bf16.msra.mxu0 0
    %1225 = vmatpush.bf16.msra.mxu0 0
    %1226 = vmatpush.bf16.msra.mxu0 0
    %1227 = vmatpush.bf16.msra.mxu0 0
    %1228 = vmatpush.bf16.msra.mxu0 0
    %1229 = vmatpush.bf16.msra.mxu0 0
    %1230 = vmatpush.bf16.msra.mxu0 %v1218
    %1231 = vmatpush.bf16.msra.mxu0 %v1217
    %1232 = vmatmul.bf16.gmra.mxu0 %v1222
    %v1233 = vpop.f32.mrf.mxu0
    %v1234 = vadd.f32 %v1208, %v1233
    %v1235 = vpop.f32.mrf.mxu0
    %v1236 = vadd.f32 %v1208, %v1235
    %1237 = vdwg.mxu0
    %v1238 = vmul.f32 %v1234, 0.5
    %v1239 = vmul.f32 %v1236, 0.5
    %v1240 = vmul.f32 %v1234, 0.044715
    %v1241 = vmul.f32 %v1236, 0.044715
    %v1242 = vmul.f32 %v1240, %v1234
    %v1243 = vmul.f32 %v1241, %v1236
    %v1244 = vmul.f32 %v1242, %v1234
    %v1245 = vmul.f32 %v1243, %v1236
    %v1246 = vadd.f32 %v1234, %v1244
    %v1247 = vadd.f32 %v1236, %v1245
    %v1248 = vmul.f32 %v1246, 0.7978846
    %v1249 = vmul.f32 %v1247, 0.7978846
    %v1250 = vtanh.pop %v1248
    %v1251 = vtanh.pop %v1249
    %v1252 = vadd.f32 %v1250, 1.0
    %v1253 = vadd.f32 %v1251, 1.0
    %v1254 = vmul.f32 %v1238, %v1252
    %v1255 = vmul.f32 %v1239, %v1253
    %v1256 = vpack.c.bf16 %v1255, %v1254
    %v1273 = vunpack.c.l.b16 %v763
    %v1274 = vunpack.c.l.b16 %v764
    %v1275 = vunpack.c.l.b16 %v765
    %v1276 = vunpack.c.l.b16 %v766
    %v1277 = vunpack.c.l.b16 %v767
    %v1278 = vunpack.c.l.b16 %v768
    %v1279 = vunpack.c.l.b16 %v769
    %v1280 = vunpack.c.l.b16 %v770
    %v1281 = vunpack.c.l.b16 %v771
    %v1282 = vunpack.c.l.b16 %v772
    %v1283 = vunpack.c.l.b16 %v773
    %v1284 = vunpack.c.l.b16 %v774
    %v1285 = vunpack.c.l.b16 %v775
    %v1286 = vunpack.c.l.b16 %v776
    %v1287 = vunpack.c.l.b16 %v777
    %v1288 = vunpack.c.l.b16 %v778
    %v1289 = vpack.c.b16 %v1274, %v1273
    %v1290 = vpack.c.b16 %v1276, %v1275
    %v1291 = vpack.c.b16 %v1278, %v1277
    %v1292 = vpack.c.b16 %v1280, %v1279
    %v1293 = vpack.c.b16 %v1282, %v1281
    %v1294 = vpack.c.b16 %v1284, %v1283
    %v1295 = vpack.c.b16 %v1286, %v1285
    %v1296 = vpack.c.b16 %v1288, %v1287
    %1305 = vmatpush.bf16.msra.mxu0 %v1296
    %1306 = vmatpush.bf16.msra.mxu0 %v1295
    %1307 = vmatpush.bf16.msra.mxu0 %v1294
    %1308 = vmatpush.bf16.msra.mxu0 %v1293
    %1309 = vmatpush.bf16.msra.mxu0 %v1292
    %1310 = vmatpush.bf16.msra.mxu0 %v1291
    %1311 = vmatpush.bf16.msra.mxu0 %v1290
    %1312 = vmatpush.bf16.msra.mxu0 %v1289
    %1313 = vmatmul.bf16.gmra.mxu0 %v1256
    %v1314 = vpop.f32.mrf.mxu0
    %v1315 = vadd.f32 0.0, %v1314
    %v1316 = vpop.f32.mrf.mxu0
    %v1317 = vadd.f32 0.0, %v1316
    %1318 = vdwg.mxu0
    %v1319 = vadd.f32 %v1155, %v1315
    %v1320 = vadd.f32 %v1156, %v1317
    %v1321 = vperm.slane %v786, 0
    %v1322 = vadd.f32 %v1319, %v1321
    %v1323 = vadd.f32 %v1320, %v1321
    %v1324 = vld [vmem:[#allocation5 + $0xe0] sm:$0xf]
    %v1325 = vld [vmem:[#allocation5 + $0xe4] sm:$0xf]
    %v1326 = vld [vmem:[#allocation5 + $0xe8] sm:$0xf]
    %v1327 = vld [vmem:[#allocation5 + $0xec] sm:$0xf]
    %v1328 = vld [vmem:[%s4 + $0x10] sm:$0x1]
    %v1329 = vld [vmem:[%s4 + $0x11] sm:$0x1]
    %v1330 = vsel %vm203, %v1322, 0.0
    %1331 = vadd.xlane.f32.xlu0 %v1330
    %v1332 = vpop.xlane.xlu0 %1331
    %v1333 = vsel %vm203, %v1323, 0.0
    %1334 = vadd.xlane.f32.xlu0 %v1333
    %v1335 = vpop.xlane.xlu0 %1334
    %v1336 = vmul.f32 %v1332, %v216
    %v1337 = vmul.f32 %v1335, %v216
    %v1338 = vsub.f32 %v1322, %v1336
    %v1339 = vsub.f32 %v1323, %v1337
    %v1340 = vmul.f32 %v1338, %v1338
    %v1341 = vmul.f32 %v1339, %v1339
    %v1342 = vsel %vm203, %v1340, 0.0
    %1343 = vadd.xlane.f32.xlu0 %v1342
    %v1344 = vpop.xlane.xlu0 %1343
    %v1345 = vsel %vm203, %v1341, 0.0
    %1346 = vadd.xlane.f32.xlu0 %v1345
    %v1347 = vpop.xlane.xlu0 %1346
    %v1348 = vmul.f32 %v1344, %v216
    %v1349 = vmul.f32 %v1347, %v216
    %v1350 = vadd.f32 %v1348, 1e-05
    %v1351 = vadd.f32 %v1349, 1e-05
    %v1352 = vrsqrt.pop %v1350
    %v1353 = vmul.f32 %v1352, %v1350
    %v1354 = vmul.f32 %v1353, %v1352
    %v1355 = vmul.f32 0.5, %v1354
    %v1356 = vsub.f32 1.5, %v1355
    %v1357 = vmul.f32 %v1352, %v1356
    %vm1358 = vweird.f32 %v1350
    %vm1359 = vweird.f32 %v1352
    %vm1360 = vmor %vm1358, %vm1359
    %v1361 = vsel %vm1360, %v1352, %v1357
    %v1362 = vrsqrt.pop %v1351
    %v1363 = vmul.f32 %v1362, %v1351
    %v1364 = vmul.f32 %v1363, %v1362
    %v1365 = vmul.f32 0.5, %v1364
    %v1366 = vsub.f32 1.5, %v1365
    %v1367 = vmul.f32 %v1362, %v1366
    %vm1368 = vweird.f32 %v1351
    %vm1369 = vweird.f32 %v1362
    %vm1370 = vmor %vm1368, %vm1369
    %v1371 = vsel %vm1370, %v1362, %v1367
    %v1372 = vmul.f32 %v1338, %v1361
    %v1373 = vmul.f32 %v1339, %v1371
    %v1374 = vperm.slane %v1328, 0
    %v1375 = vmul.f32 %v1372, %v1374
    %v1376 = vmul.f32 %v1373, %v1374
    %v1377 = vperm.slane %v1329, 0
    %v1378 = vadd.f32 %v1375, %v1377
    %v1379 = vadd.f32 %v1376, %v1377
    %v1380 = vpack.c.bf16 %v1379, %v1378
    %v1385 = vunpack.c.l.b16 %v1324
    %v1386 = vunpack.c.l.b16 %v1325
    %v1387 = vunpack.c.l.b16 %v1326
    %v1388 = vunpack.c.l.b16 %v1327
    %v1389 = vpack.c.b16 %v1386, %v1385
    %v1390 = vpack.c.b16 %v1388, %v1387
    %v1394 = vsel %vm203, %v1380, 0
    %1396 = vmatpush.bf16.msra.mxu0 0
    %1397 = vmatpush.bf16.msra.mxu0 0
    %1398 = vmatpush.bf16.msra.mxu0 0
    %1399 = vmatpush.bf16.msra.mxu0 0
    %1400 = vmatpush.bf16.msra.mxu0 0
    %1401 = vmatpush.bf16.msra.mxu0 0
    %1402 = vmatpush.bf16.msra.mxu0 %v1390
    %1403 = vmatpush.bf16.msra.mxu0 %v1389
    %1404 = vmatmul.bf16.gmra.mxu0 %v1394
    %v1405 = vpop.f32.mrf.mxu0
    %v1406 = vadd.f32 0.0, %v1405
    %v1407 = vpop.f32.mrf.mxu0
    %v1408 = vadd.f32 0.0, %v1407
    %1409 = vdwg.mxu0
    %1410 = vst [vmem:[#allocation8] sm:$0xff] %v1406
    %1411 = vst [vmem:[#allocation8 + $0x8] sm:$0xff] %v1408
    // Predicated region
    $region22: #{_lambda_.1} parent=1 // pred_check
      _
    $region23: #{_lambda_.1} parent=1 // pred_check_branch
      %1413 = sbr.rel (0) target = $region25
    $region24: #{_lambda_.1} parent=1 // pred_region
      %1415 = vsyncadd [#allocation7], 0
      %s1416 = sshll.u32 [#allocation8], 4
      %s1417 = int_to_ptr.vmem [resolvable:$true] %s1416
      %s1418 = sshll.u32 %s5, 4
      %s1419 = int_to_ptr.hbm [resolvable:$true] %s1418
      %1424 = dma.vmem_to_hbm [thread:$0]  %s1417, 256, %s1419, [#allocation7], 128, 128, 8
    $region25: #{_lambda_.1} parent=1 // pred_fallthru
      _
    // Predicated region
    $region26: #{_lambda_.1} parent=1 // pred_check
      _
    $region27: #{_lambda_.1} parent=1 // pred_check_branch
      %1426 = sbr.rel (0) target = $region29
    $region28: #{_lambda_.1} parent=1 // pred_region
      %1428 = dma.done [#allocation7], 256
    $region29: #{_lambda_.1} parent=1 // pred_fallthru
      _
    %1429 = vsyncpa [#allocation6], 1
    %1430 = vsyncpa [#allocation7], 1

</llo_original>
